<compile_context>
chip_gen: v6e
topology: v6e:2x2x1
jax: 0.10.0
libtpu: 0.0.40
codegen_flags: <defaults>
</compile_context>

<pallas_src>
import functools

import jax
import jax.numpy as jnp
from jax import lax
from jax.experimental import pallas as pl
from jax.experimental.pallas import tpu as pltpu


def _contrastive_loss_kernel(a_ref, p_ref, n_ref, out_ref, *,
                             margin, eps, total_b, tile_b):
    i = pl.program_id(0)

    # Upcast to f32 for products (matches torch f32 semantics; reference
    # tolerance is 1e-5).  The f32 temporaries are accounted for in the VMEM
    # budget computed by the wrapper.
    a = a_ref[...].astype(jnp.float32)
    p = p_ref[...].astype(jnp.float32)
    n = n_ref[...].astype(jnp.float32)

    d = a.shape[1]
    ones = jnp.ones((d, 1), jnp.float32)

    def rowsum(x):
        # Row-wise reduction on the MXU (frees the XLU/VALU; f32 accumulate).
        return jnp.dot(x, ones, preferred_element_type=jnp.float32,
                       precision=lax.Precision.HIGHEST)

    aa = rowsum(a * a)   # ||a||^2 computed once, shared by both similarities
    ap = rowsum(a * p)
    pp = rowsum(p * p)
    an = rowsum(a * n)
    nn2 = rowsum(n * n)

    # cos(x,y) = <x,y> / max(||x||*||y||, eps) == <x,y> * rsqrt(max(xx*yy, eps^2))
    eps2 = jnp.float32(eps * eps)
    pos_sim = ap * lax.rsqrt(jnp.maximum(aa * pp, eps2))
    neg_sim = an * lax.rsqrt(jnp.maximum(aa * nn2, eps2))

    hinge = jnp.maximum(jnp.float32(margin) - pos_sim + neg_sim, 0.0)  # (tile_b, 1)

    # Zero out padded rows of the final (partial) tile; jnp.where is a select,
    # so NaN/Inf from garbage padded rows is safely discarded.
    row = i * tile_b + lax.broadcasted_iota(jnp.int32, (tile_b, 1), 0)
    out_ref[...] = jnp.where(row < total_b, hinge, 0.0)


def _step_vmem_bytes(tile_b, d, itemsize):
    # 3 inputs x 2 pipeline buffers + ~4 f32 temporaries (upcasts / live product)
    return 2 * 3 * tile_b * d * itemsize + 4 * tile_b * d * 4


def contrastive_loss(anchor, positive, negative, margin=1.0, eps=1e-8, tile_b=None):
    """Pallas TPU contrastive loss. anchor/positive/negative: (B, D)."""
    assert anchor.shape == positive.shape == negative.shape
    assert anchor.ndim == 2
    B, D = anchor.shape
    itemsize = jnp.dtype(anchor.dtype).itemsize

    # Sublane packing per dtype: 8 rows f32, 16 rows bf16, 32 rows int8/fp8.
    sublane = max(8, 32 // max(itemsize, 1))

    # Pad the feature dim to a lane multiple (zeros never perturb the sums).
    D_pad = ((D + 127) // 128) * 128
    if D_pad != D:
        pad = ((0, 0), (0, D_pad - D))
        anchor = jnp.pad(anchor, pad)
        positive = jnp.pad(positive, pad)
        negative = jnp.pad(negative, pad)

    # Physical VMEM for this generation (v5e/v6e 128 MiB, v7x 64 MiB).
    try:
        vmem_cap = int(pltpu.get_tpu_info().vmem_capacity_bytes)
    except Exception:  # pragma: no cover - conservative fallback
        vmem_cap = 64 * 1024 * 1024

    b_round = ((B + sublane - 1) // sublane) * sublane

    if tile_b is None:
        # Byte-based tile choice: target ~3 MiB (small-VMEM parts) or ~6 MiB of
        # input bytes per pipeline step, rounded down to a sublane multiple.
        target_step = 3 * 2**20 if vmem_cap <= 64 * 2**20 else 6 * 2**20
        tile_b = (target_step // (3 * D_pad * itemsize) // sublane) * sublane
        tile_b = max(sublane, tile_b)
        tile_b = min(tile_b, b_round)
        # Keep double-buffered inputs + f32 temporaries under ~45% of VMEM.
        budget = int(0.45 * vmem_cap)
        while tile_b > sublane and _step_vmem_bytes(tile_b, D_pad, itemsize) > budget:
            tile_b -= sublane
        # TODO(synk): for extremely large D where even tile_b==sublane overflows the
        # budget, a second grid axis over D (partial-sum scratch) would be needed.
    else:
        assert tile_b % sublane == 0, (
            f"tile_b must be a multiple of the sublane packing ({sublane}) "
            f"for dtype {anchor.dtype}")

    num_tiles = pl.cdiv(B, tile_b)

    kernel = functools.partial(
        _contrastive_loss_kernel,
        margin=float(margin), eps=float(eps), total_b=B, tile_b=tile_b)

    in_spec = pl.BlockSpec((tile_b, D_pad), lambda i: (i, 0))
    out_spec = pl.BlockSpec((tile_b, 1), lambda i: (i, 0))

    vmem_limit = int(min(
        max(2 * _step_vmem_bytes(tile_b, D_pad, itemsize), 16 * 2**20),
        int(0.75 * vmem_cap)))

    cost = pl.CostEstimate(
        flops=10 * B * D_pad,                      # 5 muls + 5 reduce-adds / elem
        transcendentals=2 * B,                     # 2 rsqrt per row
        bytes_accessed=3 * B * D_pad * itemsize + num_tiles * tile_b * 4,
    )

    partial = pl.pallas_call(
        kernel,
        grid=(num_tiles,),
        in_specs=[in_spec, in_spec, in_spec],
        out_specs=out_spec,
        out_shape=jax.ShapeDtypeStruct((num_tiles * tile_b, 1), jnp.float32),
        compiler_params=pltpu.CompilerParams(
            dimension_semantics=("parallel",),     # no carried state -> megacore OK
            vmem_limit_bytes=vmem_limit,
        ),
        cost_estimate=cost,
    )(anchor, positive, negative)

    # Tiny final reduce / mean outside the kernel (padded rows are exact zeros).
    return jnp.sum(partial) / jnp.float32(B)


def _reference_loss(anchor, positive, negative, margin=1.0, eps=1e-8):
    a = anchor.astype(jnp.float32)
    p = positive.astype(jnp.float32)
    n = negative.astype(jnp.float32)

    def cos(x, y):
        num = jnp.sum(x * y, axis=1)
        den = jnp.linalg.norm(x, axis=1) * jnp.linalg.norm(y, axis=1)
        return num / jnp.maximum(den, eps)

    pos_sim = cos(a, p)
    neg_sim = cos(a, n)
    return jnp.mean(jnp.maximum(margin - pos_sim + neg_sim, 0.0))


if __name__ == "__main__":
    # Test 1: small case consistent with the module (batch=8, hidden=32), f32.
    # D=32 is zero-padded to 128 lanes inside the wrapper.
    k_a, k_p, k_n = jax.random.split(jax.random.PRNGKey(0), 3)
    B, D = 8, 32
    anchor = jax.random.normal(k_a, (B, D), dtype=jnp.float32)
    positive = jax.random.normal(k_p, (B, D), dtype=jnp.float32)
    negative = jax.random.normal(k_n, (B, D), dtype=jnp.float32)
    loss = jax.block_until_ready(contrastive_loss(anchor, positive, negative, margin=1.0))
    ref = _reference_loss(anchor, positive, negative, margin=1.0)
    assert jnp.allclose(loss, ref, atol=2e-5, rtol=2e-5), (loss, ref)

    # Test 2: batch not a multiple of the tile -> multi-tile parallel grid + masking.
    k_a2, k_p2, k_n2 = jax.random.split(jax.random.PRNGKey(1), 3)
    B2, D2 = 20, 128
    a2 = jax.random.normal(k_a2, (B2, D2), dtype=jnp.float32)
    p2 = jax.random.normal(k_p2, (B2, D2), dtype=jnp.float32)
    n2 = jax.random.normal(k_n2, (B2, D2), dtype=jnp.float32)
    loss2 = jax.block_until_ready(contrastive_loss(a2, p2, n2, margin=0.5, tile_b=8))
    ref2 = _reference_loss(a2, p2, n2, margin=0.5)
    assert jnp.allclose(loss2, ref2, atol=2e-5, rtol=2e-5), (loss2, ref2)

    # Test 3: bf16 inputs (half HBM bytes), 16-row sublane-aligned tiles,
    # f32 accumulation inside the kernel.
    a3 = a2.astype(jnp.bfloat16)
    p3 = p2.astype(jnp.bfloat16)
    n3 = n2.astype(jnp.bfloat16)
    loss3 = jax.block_until_ready(contrastive_loss(a3, p3, n3, margin=1.0, tile_b=16))
    ref3 = _reference_loss(a3, p3, n3, margin=1.0)
    assert jnp.allclose(loss3, ref3, atol=2e-5, rtol=2e-5), (loss3, ref3)

    # Test 4: default (byte-budget) tiling path, larger batch.
    k_a4, k_p4, k_n4 = jax.random.split(jax.random.PRNGKey(2), 3)
    B4, D4 = 300, 256
    a4 = jax.random.normal(k_a4, (B4, D4), dtype=jnp.float32)
    p4 = jax.random.normal(k_p4, (B4, D4), dtype=jnp.float32)
    n4 = jax.random.normal(k_n4, (B4, D4), dtype=jnp.float32)
    loss4 = jax.block_until_ready(contrastive_loss(a4, p4, n4, margin=1.0))
    ref4 = _reference_loss(a4, p4, n4, margin=1.0)
    assert jnp.allclose(loss4, ref4, atol=2e-5, rtol=2e-5), (loss4, ref4)

    print("KERNEL_OK")
</pallas_src>

<mosaic_0001>
module attributes {stable_mosaic.version = 11 : i64} {
  func.func @_contrastive_loss_kernel(%arg0: i32, %arg1: memref<8x128xf32, #tpu.memory_space<vmem>>, %arg2: memref<8x128xf32, #tpu.memory_space<vmem>>, %arg3: memref<8x128xf32, #tpu.memory_space<vmem>>, %arg4: memref<8x1xf32, #tpu.memory_space<vmem>>) attributes {dimension_semantics = [#tpu.dimension_semantics<parallel>], iteration_bounds = array<i64: 1>, scalar_prefetch = 0 : i64, scratch_operands = 0 : i64, tpu.core_type = #tpu.core_type<tc>, window_params = [{transform_indices = @transform_0, window_bounds = array<i64: 8, 128>}, {transform_indices = @transform_1, window_bounds = array<i64: 8, 128>}, {transform_indices = @transform_2, window_bounds = array<i64: 8, 128>}, {transform_indices = @transform_3, window_bounds = array<i64: 8, 1>}]} {
    %c0 = arith.constant 0 : index
    %c0_0 = arith.constant 0 : index
    %0 = vector.load %arg1[%c0, %c0_0] : memref<8x128xf32, #tpu.memory_space<vmem>>, vector<8x128xf32>
    %c0_1 = arith.constant 0 : index
    %c0_2 = arith.constant 0 : index
    %1 = vector.load %arg2[%c0_1, %c0_2] : memref<8x128xf32, #tpu.memory_space<vmem>>, vector<8x128xf32>
    %c0_3 = arith.constant 0 : index
    %c0_4 = arith.constant 0 : index
    %2 = vector.load %arg3[%c0_3, %c0_4] : memref<8x128xf32, #tpu.memory_space<vmem>>, vector<8x128xf32>
    %cst = arith.constant 1.000000e+00 : f32
    %3 = vector.broadcast %cst : f32 to vector<128x1xf32>
    %4 = arith.mulf %0, %0 : vector<8x128xf32>
    %cst_5 = arith.constant dense<0.000000e+00> : vector<8x1xf32>
    %5 = tpu.matmul %4, %3, %cst_5 {dimension_numbers = #tpu.dot_dimension_numbers<[1], [0], [0], [1], [0, 0, 1, 1], [], []>, precision = #tpu.contract_precision<fp32>} : vector<8x128xf32>, vector<128x1xf32>, vector<8x1xf32> -> vector<8x1xf32>
    %6 = arith.mulf %0, %1 : vector<8x128xf32>
    %cst_6 = arith.constant dense<0.000000e+00> : vector<8x1xf32>
    %7 = tpu.matmul %6, %3, %cst_6 {dimension_numbers = #tpu.dot_dimension_numbers<[1], [0], [0], [1], [0, 0, 1, 1], [], []>, precision = #tpu.contract_precision<fp32>} : vector<8x128xf32>, vector<128x1xf32>, vector<8x1xf32> -> vector<8x1xf32>
    %8 = arith.mulf %1, %1 : vector<8x128xf32>
    %cst_7 = arith.constant dense<0.000000e+00> : vector<8x1xf32>
    %9 = tpu.matmul %8, %3, %cst_7 {dimension_numbers = #tpu.dot_dimension_numbers<[1], [0], [0], [1], [0, 0, 1, 1], [], []>, precision = #tpu.contract_precision<fp32>} : vector<8x128xf32>, vector<128x1xf32>, vector<8x1xf32> -> vector<8x1xf32>
    %10 = arith.mulf %0, %2 : vector<8x128xf32>
    %cst_8 = arith.constant dense<0.000000e+00> : vector<8x1xf32>
    %11 = tpu.matmul %10, %3, %cst_8 {dimension_numbers = #tpu.dot_dimension_numbers<[1], [0], [0], [1], [0, 0, 1, 1], [], []>, precision = #tpu.contract_precision<fp32>} : vector<8x128xf32>, vector<128x1xf32>, vector<8x1xf32> -> vector<8x1xf32>
    %12 = arith.mulf %2, %2 : vector<8x128xf32>
    %cst_9 = arith.constant dense<0.000000e+00> : vector<8x1xf32>
    %13 = tpu.matmul %12, %3, %cst_9 {dimension_numbers = #tpu.dot_dimension_numbers<[1], [0], [0], [1], [0, 0, 1, 1], [], []>, precision = #tpu.contract_precision<fp32>} : vector<8x128xf32>, vector<128x1xf32>, vector<8x1xf32> -> vector<8x1xf32>
    %14 = arith.mulf %5, %9 : vector<8x1xf32>
    %cst_10 = arith.constant 1.000000e-16 : f32
    %15 = vector.broadcast %cst_10 : f32 to vector<8x1xf32>
    %16 = arith.maximumf %14, %15 : vector<8x1xf32>
    %17 = math.rsqrt %16 : vector<8x1xf32>
    %18 = arith.mulf %7, %17 : vector<8x1xf32>
    %19 = arith.mulf %5, %13 : vector<8x1xf32>
    %cst_11 = arith.constant 1.000000e-16 : f32
    %20 = vector.broadcast %cst_11 : f32 to vector<8x1xf32>
    %21 = arith.maximumf %19, %20 : vector<8x1xf32>
    %22 = math.rsqrt %21 : vector<8x1xf32>
    %23 = arith.mulf %11, %22 : vector<8x1xf32>
    %cst_12 = arith.constant 1.000000e+00 : f32
    %24 = vector.broadcast %cst_12 : f32 to vector<8x1xf32>
    %25 = arith.subf %24, %18 : vector<8x1xf32>
    %26 = arith.addf %25, %23 : vector<8x1xf32>
    %cst_13 = arith.constant 0.000000e+00 : f32
    %27 = vector.broadcast %cst_13 : f32 to vector<8x1xf32>
    %28 = arith.maximumf %26, %27 : vector<8x1xf32>
    %c8_i32 = arith.constant 8 : i32
    %29 = arith.muli %arg0, %c8_i32 : i32
    %30 = tpu.iota {dimensions = array<i32: 0>} : vector<8x1xi32>
    %31 = vector.broadcast %29 : i32 to vector<8x1xi32>
    %32 = arith.addi %31, %30 : vector<8x1xi32>
    %c8_i32_14 = arith.constant 8 : i32
    %33 = vector.broadcast %c8_i32_14 : i32 to vector<8x1xi32>
    %34 = arith.cmpi slt, %32, %33 : vector<8x1xi32>
    %cst_15 = arith.constant 0.000000e+00 : f32
    %35 = vector.broadcast %cst_15 : f32 to vector<8x1xf32>
    %36 = arith.select %34, %28, %35 : vector<8x1xi1>, vector<8x1xf32>
    %c0_16 = arith.constant 0 : index
    %c0_17 = arith.constant 0 : index
    %37 = vector.load %arg4[%c0_16, %c0_17] : memref<8x1xf32, #tpu.memory_space<vmem>>, vector<8x1xf32>
    tpu.vector_store %arg4[%c0_16, %c0_17], %36 {strides = array<i32>} : memref<8x1xf32, #tpu.memory_space<vmem>>, vector<8x1xf32>,
    return
  }
  func.func @transform_0(%arg0: i32) -> (i32, i32) {
    %c0_i32 = arith.constant 0 : i32
    %c0_i32_0 = arith.constant 0 : i32
    return %arg0, %c0_i32 : i32, i32
  }
  func.func @transform_1(%arg0: i32) -> (i32, i32) {
    %c0_i32 = arith.constant 0 : i32
    %c0_i32_0 = arith.constant 0 : i32
    return %arg0, %c0_i32 : i32, i32
  }
  func.func @transform_2(%arg0: i32) -> (i32, i32) {
    %c0_i32 = arith.constant 0 : i32
    %c0_i32_0 = arith.constant 0 : i32
    return %arg0, %c0_i32 : i32, i32
  }
  func.func @transform_3(%arg0: i32) -> (i32, i32) {
    %c0_i32 = arith.constant 0 : i32
    %c0_i32_0 = arith.constant 0 : i32
    return %arg0, %c0_i32 : i32, i32
  }
}

</mosaic_0001>

<llo_original>
// kernel: tpu_custom_call.1
$region0: #{tpu_custom_call.1}
  #allocation0 [shape = 'u32[]', space=smem, size = 0x4, offset = 0x4, fixed_abs, tag = 'smem constant byte address 0x4 - core index']
  #allocation1 [shape = 'u32[144,128]{1,0:T(1,128)}', space=vmem, size = 0x12000, scoped, tag = 'internal scratch']
  %s0 = inlined_call_operand.hbm [shape: f32[8,128], index: 0, kind: input, shape index: {}]
  %s1 = inlined_call_operand.hbm [shape: f32[8,128], index: 1, kind: input, shape index: {}]
  %s2 = inlined_call_operand.hbm [shape: f32[8,128], index: 2, kind: input, shape index: {}]
  %s3 = inlined_call_operand.vmem [shape: f32[8,1], index: 3, kind: output, shape index: {}]
  %s4 = sld [smem:[#allocation0]]
  $region34: #{tpu_custom_call.1} parent=0
    _
  %s6 = ssub.s32 1, %s4
  %s7 = scalar_select 0, %s6, %s4
  $region1: #{tpu_custom_call.1} parent=0
    #allocation2 [shape = 'u8[4096]{0}', space=vmem, size = 0x1000, scoped, tag = 'input window, operand 0, single buffered']
    #allocation3 [shape = 's32[1]{0}', space=sflag, size = 0x4, scoped, tag = 'scoped memory for tpu_custom_call.1']
    #allocation4 [shape = 'u8[4096]{0}', space=vmem, size = 0x1000, scoped, tag = 'input window, operand 1, single buffered']
    #allocation5 [shape = 's32[1]{0}', space=sflag, size = 0x4, scoped, tag = 'scoped memory for tpu_custom_call.1']
    #allocation6 [shape = 'u8[4096]{0}', space=vmem, size = 0x1000, scoped, tag = 'input window, operand 2, single buffered']
    %8 = vsyncpa [#allocation3], 0
    %9 = vsyncpa [#allocation5], 0
    // Predicated region
    $region2: #{tpu_custom_call.1} parent=1 // pred_check
      _
    $region3: #{tpu_custom_call.1} parent=1 // pred_check_branch
      %11 = sbr.rel (0) target = $region5
    $region4: #{tpu_custom_call.1} parent=1 // pred_region
      %s13 = ssub.s32 128, 128
      %14 = vsyncadd [#allocation3], %s13
      %s16 = sshll.u32 [#allocation2], 4
      %s17 = int_to_ptr.vmem [resolvable:$true] %s16
      %19 = dma.hbm_to_vmem [thread:$0]  %s0, 128, %s17, [#allocation3]
    $region5: #{tpu_custom_call.1} parent=1 // pred_fallthru
      _
    // Predicated region
    $region6: #{tpu_custom_call.1} parent=1 // pred_check
      _
    $region7: #{tpu_custom_call.1} parent=1 // pred_check_branch
      %21 = sbr.rel (0) target = $region9
    $region8: #{tpu_custom_call.1} parent=1 // pred_region
      %s23 = ssub.s32 128, 128
      %24 = vsyncadd [#allocation5], %s23
      %s26 = sshll.u32 [#allocation4], 4
      %s27 = int_to_ptr.vmem [resolvable:$true] %s26
      %29 = dma.hbm_to_vmem [thread:$0]  %s1, 128, %s27, [#allocation5]
    $region9: #{tpu_custom_call.1} parent=1 // pred_fallthru
      _
    // Predicated region
    $region10: #{tpu_custom_call.1} parent=1 // pred_check
      _
    $region11: #{tpu_custom_call.1} parent=1 // pred_check_branch
      %31 = sbr.rel (0) target = $region13
    $region12: #{tpu_custom_call.1} parent=1 // pred_region
      %s33 = ssub.s32 128, 128
      %34 = vsyncadd [#allocation5], %s33
      %s36 = sshll.u32 [#allocation6], 4
      %s37 = int_to_ptr.vmem [resolvable:$true] %s36
      %39 = dma.hbm_to_vmem [thread:$0]  %s2, 128, %s37, [#allocation5]
    $region13: #{tpu_custom_call.1} parent=1 // pred_fallthru
      _
    // Predicated region
    $region14: #{tpu_custom_call.1} parent=1 // pred_check
      _
    $region15: #{tpu_custom_call.1} parent=1 // pred_check_branch
      %41 = sbr.rel (0) target = $region17
    $region16: #{tpu_custom_call.1} parent=1 // pred_region
      %42 = dma.done [#allocation3], 128
    $region17: #{tpu_custom_call.1} parent=1 // pred_fallthru
      _
    // Predicated region
    $region18: #{tpu_custom_call.1} parent=1 // pred_check
      _
    $region19: #{tpu_custom_call.1} parent=1 // pred_check_branch
      %44 = sbr.rel (0) target = $region21
    $region20: #{tpu_custom_call.1} parent=1 // pred_region
      %45 = dma.done [#allocation5], 128
    $region21: #{tpu_custom_call.1} parent=1 // pred_fallthru
      _
    // Predicated region
    $region22: #{tpu_custom_call.1} parent=1 // pred_check
      _
    $region23: #{tpu_custom_call.1} parent=1 // pred_check_branch
      %47 = sbr.rel (0) target = $region25
    $region24: #{tpu_custom_call.1} parent=1 // pred_region
      %48 = dma.done [#allocation5], 128
    $region25: #{tpu_custom_call.1} parent=1 // pred_fallthru
      _
    %v49 = vld [vmem:[#allocation2] sm:$0xff]
    %v50 = vld [vmem:[#allocation4] sm:$0xff]
    %v51 = vld [vmem:[#allocation6] sm:$0xff]
    %v52 = vmul.f32 %v49, %v49
    %53 = vmatprep.subr.mxu0 0.0
    %54 = vmatpush1.msra.mxu0 1.0
    %55 = vmatprep.subr.mxu0 0.0
    %56 = vmatpush1.msra.mxu0 1.0
    %57 = vmatprep.subr.mxu0 0.0
    %58 = vmatpush1.msra.mxu0 1.0
    %59 = vmatprep.subr.mxu0 0.0
    %60 = vmatpush1.msra.mxu0 1.0
    %61 = vmatprep.subr.mxu0 0.0
    %62 = vmatpush1.msra.mxu0 1.0
    %63 = vmatprep.subr.mxu0 0.0
    %64 = vmatpush1.msra.mxu0 1.0
    %65 = vmatprep.subr.mxu0 0.0
    %66 = vmatpush1.msra.mxu0 1.0
    %67 = vmatprep.subr.mxu0 0.0
    %68 = vmatpush1.msra.mxu0 1.0
    %69 = vmatprep.subr.mxu0 0.0
    %70 = vmatpush1.msra.mxu0 1.0
    %71 = vmatprep.subr.mxu0 0.0
    %72 = vmatpush1.msra.mxu0 1.0
    %73 = vmatprep.subr.mxu0 0.0
    %74 = vmatpush1.msra.mxu0 1.0
    %75 = vmatprep.subr.mxu0 0.0
    %76 = vmatpush1.msra.mxu0 1.0
    %77 = vmatprep.subr.mxu0 0.0
    %78 = vmatpush1.msra.mxu0 1.0
    %79 = vmatprep.subr.mxu0 0.0
    %80 = vmatpush1.msra.mxu0 1.0
    %81 = vmatprep.subr.mxu0 0.0
    %82 = vmatpush1.msra.mxu0 1.0
    %83 = vmatprep.subr.mxu0 0.0
    %84 = vmatpush1.msra.mxu0 1.0
    %85 = vmatprep.subr.mxu0 0.0
    %86 = vmatpush2.msra.mxu0 0.0
    %87 = vmatprep.subr.mxu0 0.0
    %88 = vmatpush2.msra.mxu0 0.0
    %89 = vmatprep.subr.mxu0 0.0
    %90 = vmatpush2.msra.mxu0 0.0
    %91 = vmatprep.subr.mxu0 0.0
    %92 = vmatpush2.msra.mxu0 0.0
    %93 = vmatprep.subr.mxu0 0.0
    %94 = vmatpush2.msra.mxu0 0.0
    %95 = vmatprep.subr.mxu0 0.0
    %96 = vmatpush2.msra.mxu0 0.0
    %97 = vmatprep.subr.mxu0 0.0
    %98 = vmatpush2.msra.mxu0 0.0
    %99 = vmatprep.subr.mxu0 0.0
    %100 = vmatpush2.msra.mxu0 0.0
    %101 = vmatprep.subr.mxu0 0.0
    %102 = vmatpush2.msra.mxu0 0.0
    %103 = vmatprep.subr.mxu0 0.0
    %104 = vmatpush2.msra.mxu0 0.0
    %105 = vmatprep.subr.mxu0 0.0
    %106 = vmatpush2.msra.mxu0 0.0
    %107 = vmatprep.subr.mxu0 0.0
    %108 = vmatpush2.msra.mxu0 0.0
    %109 = vmatprep.subr.mxu0 0.0
    %110 = vmatpush2.msra.mxu0 0.0
    %111 = vmatprep.subr.mxu0 0.0
    %112 = vmatpush2.msra.mxu0 0.0
    %113 = vmatprep.subr.mxu0 0.0
    %114 = vmatpush2.msra.mxu0 0.0
    %115 = vmatprep.subr.mxu0 0.0
    %116 = vmatpush2.msra.mxu0 0.0
    %117 = vmatprep.mubr.f32.mxu0 0.0
    %v118 = vand.u32 %v52, 4294901760
    %v119 = vsub.f32 %v52, %v118
    %v120 = vand.u32 %v119, 4294901760
    %v121 = vsub.f32 %v119, %v120
    %v122 = vand.u32 %v121, 4294901760
    %123 = vmatmul.mubr.f32.gmra.mxu0 %v122
    %v124 = vpop.f32.mrf.mxu0
    %v125 = vadd.f32 0.0, %v124
    %v126 = vpop.f32.mrf.mxu0
    %127 = vdwg.mxu0
    %128 = vmatprep.subr.mxu0 0.0
    %129 = vmatpush1.msra.mxu0 0.0
    %130 = vmatprep.subr.mxu0 0.0
    %131 = vmatpush1.msra.mxu0 0.0
    %132 = vmatprep.subr.mxu0 0.0
    %133 = vmatpush1.msra.mxu0 0.0
    %134 = vmatprep.subr.mxu0 0.0
    %135 = vmatpush1.msra.mxu0 0.0
    %136 = vmatprep.subr.mxu0 0.0
    %137 = vmatpush1.msra.mxu0 0.0
    %138 = vmatprep.subr.mxu0 0.0
    %139 = vmatpush1.msra.mxu0 0.0
    %140 = vmatprep.subr.mxu0 0.0
    %141 = vmatpush1.msra.mxu0 0.0
    %142 = vmatprep.subr.mxu0 0.0
    %143 = vmatpush1.msra.mxu0 0.0
    %144 = vmatprep.subr.mxu0 0.0
    %145 = vmatpush1.msra.mxu0 0.0
    %146 = vmatprep.subr.mxu0 0.0
    %147 = vmatpush1.msra.mxu0 0.0
    %148 = vmatprep.subr.mxu0 0.0
    %149 = vmatpush1.msra.mxu0 0.0
    %150 = vmatprep.subr.mxu0 0.0
    %151 = vmatpush1.msra.mxu0 0.0
    %152 = vmatprep.subr.mxu0 0.0
    %153 = vmatpush1.msra.mxu0 0.0
    %154 = vmatprep.subr.mxu0 0.0
    %155 = vmatpush1.msra.mxu0 0.0
    %156 = vmatprep.subr.mxu0 0.0
    %157 = vmatpush1.msra.mxu0 0.0
    %158 = vmatprep.subr.mxu0 0.0
    %159 = vmatpush1.msra.mxu0 0.0
    %160 = vmatprep.subr.mxu0 0.0
    %161 = vmatpush2.msra.mxu0 0.0
    %162 = vmatprep.subr.mxu0 0.0
    %163 = vmatpush2.msra.mxu0 0.0
    %164 = vmatprep.subr.mxu0 0.0
    %165 = vmatpush2.msra.mxu0 0.0
    %166 = vmatprep.subr.mxu0 0.0
    %167 = vmatpush2.msra.mxu0 0.0
    %168 = vmatprep.subr.mxu0 0.0
    %169 = vmatpush2.msra.mxu0 0.0
    %170 = vmatprep.subr.mxu0 0.0
    %171 = vmatpush2.msra.mxu0 0.0
    %172 = vmatprep.subr.mxu0 0.0
    %173 = vmatpush2.msra.mxu0 0.0
    %174 = vmatprep.subr.mxu0 0.0
    %175 = vmatpush2.msra.mxu0 0.0
    %176 = vmatprep.subr.mxu0 0.0
    %177 = vmatpush2.msra.mxu0 0.0
    %178 = vmatprep.subr.mxu0 0.0
    %179 = vmatpush2.msra.mxu0 0.0
    %180 = vmatprep.subr.mxu0 0.0
    %181 = vmatpush2.msra.mxu0 0.0
    %182 = vmatprep.subr.mxu0 0.0
    %183 = vmatpush2.msra.mxu0 0.0
    %184 = vmatprep.subr.mxu0 0.0
    %185 = vmatpush2.msra.mxu0 0.0
    %186 = vmatprep.subr.mxu0 0.0
    %187 = vmatpush2.msra.mxu0 0.0
    %188 = vmatprep.subr.mxu0 0.0
    %189 = vmatpush2.msra.mxu0 0.0
    %190 = vmatprep.subr.mxu0 0.0
    %191 = vmatpush2.msra.mxu0 0.0
    %192 = vmatprep.mubr.f32.mxu0 0.0
    %v193 = vand.u32 %v52, 4294901760
    %194 = vmatmul.mubr.f32.gmra.mxu0 %v193
    %v195 = vpop.f32.mrf.mxu0
    %v196 = vadd.f32 %v125, %v195
    %v197 = vpop.f32.mrf.mxu0
    %198 = vdwg.mxu0
    %199 = vmatprep.subr.mxu0 0.0
    %200 = vmatpush1.msra.mxu0 0.0
    %201 = vmatprep.subr.mxu0 0.0
    %202 = vmatpush1.msra.mxu0 0.0
    %203 = vmatprep.subr.mxu0 0.0
    %204 = vmatpush1.msra.mxu0 0.0
    %205 = vmatprep.subr.mxu0 0.0
    %206 = vmatpush1.msra.mxu0 0.0
    %207 = vmatprep.subr.mxu0 0.0
    %208 = vmatpush1.msra.mxu0 0.0
    %209 = vmatprep.subr.mxu0 0.0
    %210 = vmatpush1.msra.mxu0 0.0
    %211 = vmatprep.subr.mxu0 0.0
    %212 = vmatpush1.msra.mxu0 0.0
    %213 = vmatprep.subr.mxu0 0.0
    %214 = vmatpush1.msra.mxu0 0.0
    %215 = vmatprep.subr.mxu0 0.0
    %216 = vmatpush1.msra.mxu0 0.0
    %217 = vmatprep.subr.mxu0 0.0
    %218 = vmatpush1.msra.mxu0 0.0
    %219 = vmatprep.subr.mxu0 0.0
    %220 = vmatpush1.msra.mxu0 0.0
    %221 = vmatprep.subr.mxu0 0.0
    %222 = vmatpush1.msra.mxu0 0.0
    %223 = vmatprep.subr.mxu0 0.0
    %224 = vmatpush1.msra.mxu0 0.0
    %225 = vmatprep.subr.mxu0 0.0
    %226 = vmatpush1.msra.mxu0 0.0
    %227 = vmatprep.subr.mxu0 0.0
    %228 = vmatpush1.msra.mxu0 0.0
    %229 = vmatprep.subr.mxu0 0.0
    %230 = vmatpush1.msra.mxu0 0.0
    %231 = vmatprep.subr.mxu0 0.0
    %232 = vmatpush2.msra.mxu0 0.0
    %233 = vmatprep.subr.mxu0 0.0
    %234 = vmatpush2.msra.mxu0 0.0
    %235 = vmatprep.subr.mxu0 0.0
    %236 = vmatpush2.msra.mxu0 0.0
    %237 = vmatprep.subr.mxu0 0.0
    %238 = vmatpush2.msra.mxu0 0.0
    %239 = vmatprep.subr.mxu0 0.0
    %240 = vmatpush2.msra.mxu0 0.0
    %241 = vmatprep.subr.mxu0 0.0
    %242 = vmatpush2.msra.mxu0 0.0
    %243 = vmatprep.subr.mxu0 0.0
    %244 = vmatpush2.msra.mxu0 0.0
    %245 = vmatprep.subr.mxu0 0.0
    %246 = vmatpush2.msra.mxu0 0.0
    %247 = vmatprep.subr.mxu0 0.0
    %248 = vmatpush2.msra.mxu0 0.0
    %249 = vmatprep.subr.mxu0 0.0
    %250 = vmatpush2.msra.mxu0 0.0
    %251 = vmatprep.subr.mxu0 0.0
    %252 = vmatpush2.msra.mxu0 0.0
    %253 = vmatprep.subr.mxu0 0.0
    %254 = vmatpush2.msra.mxu0 0.0
    %255 = vmatprep.subr.mxu0 0.0
    %256 = vmatpush2.msra.mxu0 0.0
    %257 = vmatprep.subr.mxu0 0.0
    %258 = vmatpush2.msra.mxu0 0.0
    %259 = vmatprep.subr.mxu0 0.0
    %260 = vmatpush2.msra.mxu0 0.0
    %261 = vmatprep.subr.mxu0 0.0
    %262 = vmatpush2.msra.mxu0 0.0
    %263 = vmatprep.mubr.f32.mxu0 0.0
    %v264 = vand.u32 %v52, 4294901760
    %v265 = vsub.f32 %v52, %v264
    %266 = vmatmul.mubr.f32.gmra.mxu0 %v265
    %v267 = vpop.f32.mrf.mxu0
    %v268 = vadd.f32 %v196, %v267
    %v269 = vpop.f32.mrf.mxu0
    %270 = vdwg.mxu0
    %271 = vmatprep.subr.mxu0 0.0
    %272 = vmatpush1.msra.mxu0 1.0
    %273 = vmatprep.subr.mxu0 0.0
    %274 = vmatpush1.msra.mxu0 1.0
    %275 = vmatprep.subr.mxu0 0.0
    %276 = vmatpush1.msra.mxu0 1.0
    %277 = vmatprep.subr.mxu0 0.0
    %278 = vmatpush1.msra.mxu0 1.0
    %279 = vmatprep.subr.mxu0 0.0
    %280 = vmatpush1.msra.mxu0 1.0
    %281 = vmatprep.subr.mxu0 0.0
    %282 = vmatpush1.msra.mxu0 1.0
    %283 = vmatprep.subr.mxu0 0.0
    %284 = vmatpush1.msra.mxu0 1.0
    %285 = vmatprep.subr.mxu0 0.0
    %286 = vmatpush1.msra.mxu0 1.0
    %287 = vmatprep.subr.mxu0 0.0
    %288 = vmatpush1.msra.mxu0 1.0
    %289 = vmatprep.subr.mxu0 0.0
    %290 = vmatpush1.msra.mxu0 1.0
    %291 = vmatprep.subr.mxu0 0.0
    %292 = vmatpush1.msra.mxu0 1.0
    %293 = vmatprep.subr.mxu0 0.0
    %294 = vmatpush1.msra.mxu0 1.0
    %295 = vmatprep.subr.mxu0 0.0
    %296 = vmatpush1.msra.mxu0 1.0
    %297 = vmatprep.subr.mxu0 0.0
    %298 = vmatpush1.msra.mxu0 1.0
    %299 = vmatprep.subr.mxu0 0.0
    %300 = vmatpush1.msra.mxu0 1.0
    %301 = vmatprep.subr.mxu0 0.0
    %302 = vmatpush1.msra.mxu0 1.0
    %303 = vmatprep.subr.mxu0 0.0
    %304 = vmatpush2.msra.mxu0 0.0
    %305 = vmatprep.subr.mxu0 0.0
    %306 = vmatpush2.msra.mxu0 0.0
    %307 = vmatprep.subr.mxu0 0.0
    %308 = vmatpush2.msra.mxu0 0.0
    %309 = vmatprep.subr.mxu0 0.0
    %310 = vmatpush2.msra.mxu0 0.0
    %311 = vmatprep.subr.mxu0 0.0
    %312 = vmatpush2.msra.mxu0 0.0
    %313 = vmatprep.subr.mxu0 0.0
    %314 = vmatpush2.msra.mxu0 0.0
    %315 = vmatprep.subr.mxu0 0.0
    %316 = vmatpush2.msra.mxu0 0.0
    %317 = vmatprep.subr.mxu0 0.0
    %318 = vmatpush2.msra.mxu0 0.0
    %319 = vmatprep.subr.mxu0 0.0
    %320 = vmatpush2.msra.mxu0 0.0
    %321 = vmatprep.subr.mxu0 0.0
    %322 = vmatpush2.msra.mxu0 0.0
    %323 = vmatprep.subr.mxu0 0.0
    %324 = vmatpush2.msra.mxu0 0.0
    %325 = vmatprep.subr.mxu0 0.0
    %326 = vmatpush2.msra.mxu0 0.0
    %327 = vmatprep.subr.mxu0 0.0
    %328 = vmatpush2.msra.mxu0 0.0
    %329 = vmatprep.subr.mxu0 0.0
    %330 = vmatpush2.msra.mxu0 0.0
    %331 = vmatprep.subr.mxu0 0.0
    %332 = vmatpush2.msra.mxu0 0.0
    %333 = vmatprep.subr.mxu0 0.0
    %334 = vmatpush2.msra.mxu0 0.0
    %335 = vmatprep.mubr.f32.mxu0 0.0
    %v336 = vand.u32 %v52, 4294901760
    %v337 = vsub.f32 %v52, %v336
    %v338 = vand.u32 %v337, 4294901760
    %339 = vmatmul.mubr.f32.gmra.mxu0 %v338
    %v340 = vpop.f32.mrf.mxu0
    %v341 = vadd.f32 %v268, %v340
    %v342 = vpop.f32.mrf.mxu0
    %343 = vdwg.mxu0
    %344 = vmatprep.subr.mxu0 0.0
    %345 = vmatpush1.msra.mxu0 0.0
    %346 = vmatprep.subr.mxu0 0.0
    %347 = vmatpush1.msra.mxu0 0.0
    %348 = vmatprep.subr.mxu0 0.0
    %349 = vmatpush1.msra.mxu0 0.0
    %350 = vmatprep.subr.mxu0 0.0
    %351 = vmatpush1.msra.mxu0 0.0
    %352 = vmatprep.subr.mxu0 0.0
    %353 = vmatpush1.msra.mxu0 0.0
    %354 = vmatprep.subr.mxu0 0.0
    %355 = vmatpush1.msra.mxu0 0.0
    %356 = vmatprep.subr.mxu0 0.0
    %357 = vmatpush1.msra.mxu0 0.0
    %358 = vmatprep.subr.mxu0 0.0
    %359 = vmatpush1.msra.mxu0 0.0
    %360 = vmatprep.subr.mxu0 0.0
    %361 = vmatpush1.msra.mxu0 0.0
    %362 = vmatprep.subr.mxu0 0.0
    %363 = vmatpush1.msra.mxu0 0.0
    %364 = vmatprep.subr.mxu0 0.0
    %365 = vmatpush1.msra.mxu0 0.0
    %366 = vmatprep.subr.mxu0 0.0
    %367 = vmatpush1.msra.mxu0 0.0
    %368 = vmatprep.subr.mxu0 0.0
    %369 = vmatpush1.msra.mxu0 0.0
    %370 = vmatprep.subr.mxu0 0.0
    %371 = vmatpush1.msra.mxu0 0.0
    %372 = vmatprep.subr.mxu0 0.0
    %373 = vmatpush1.msra.mxu0 0.0
    %374 = vmatprep.subr.mxu0 0.0
    %375 = vmatpush1.msra.mxu0 0.0
    %376 = vmatprep.subr.mxu0 0.0
    %377 = vmatpush2.msra.mxu0 0.0
    %378 = vmatprep.subr.mxu0 0.0
    %379 = vmatpush2.msra.mxu0 0.0
    %380 = vmatprep.subr.mxu0 0.0
    %381 = vmatpush2.msra.mxu0 0.0
    %382 = vmatprep.subr.mxu0 0.0
    %383 = vmatpush2.msra.mxu0 0.0
    %384 = vmatprep.subr.mxu0 0.0
    %385 = vmatpush2.msra.mxu0 0.0
    %386 = vmatprep.subr.mxu0 0.0
    %387 = vmatpush2.msra.mxu0 0.0
    %388 = vmatprep.subr.mxu0 0.0
    %389 = vmatpush2.msra.mxu0 0.0
    %390 = vmatprep.subr.mxu0 0.0
    %391 = vmatpush2.msra.mxu0 0.0
    %392 = vmatprep.subr.mxu0 0.0
    %393 = vmatpush2.msra.mxu0 0.0
    %394 = vmatprep.subr.mxu0 0.0
    %395 = vmatpush2.msra.mxu0 0.0
    %396 = vmatprep.subr.mxu0 0.0
    %397 = vmatpush2.msra.mxu0 0.0
    %398 = vmatprep.subr.mxu0 0.0
    %399 = vmatpush2.msra.mxu0 0.0
    %400 = vmatprep.subr.mxu0 0.0
    %401 = vmatpush2.msra.mxu0 0.0
    %402 = vmatprep.subr.mxu0 0.0
    %403 = vmatpush2.msra.mxu0 0.0
    %404 = vmatprep.subr.mxu0 0.0
    %405 = vmatpush2.msra.mxu0 0.0
    %406 = vmatprep.subr.mxu0 0.0
    %407 = vmatpush2.msra.mxu0 0.0
    %408 = vmatprep.mubr.f32.mxu0 0.0
    %v409 = vand.u32 %v52, 4294901760
    %410 = vmatmul.mubr.f32.gmra.mxu0 %v409
    %v411 = vpop.f32.mrf.mxu0
    %v412 = vadd.f32 %v341, %v411
    %v413 = vpop.f32.mrf.mxu0
    %414 = vdwg.mxu0
    %415 = vmatprep.subr.mxu0 0.0
    %416 = vmatpush1.msra.mxu0 1.0
    %417 = vmatprep.subr.mxu0 0.0
    %418 = vmatpush1.msra.mxu0 1.0
    %419 = vmatprep.subr.mxu0 0.0
    %420 = vmatpush1.msra.mxu0 1.0
    %421 = vmatprep.subr.mxu0 0.0
    %422 = vmatpush1.msra.mxu0 1.0
    %423 = vmatprep.subr.mxu0 0.0
    %424 = vmatpush1.msra.mxu0 1.0
    %425 = vmatprep.subr.mxu0 0.0
    %426 = vmatpush1.msra.mxu0 1.0
    %427 = vmatprep.subr.mxu0 0.0
    %428 = vmatpush1.msra.mxu0 1.0
    %429 = vmatprep.subr.mxu0 0.0
    %430 = vmatpush1.msra.mxu0 1.0
    %431 = vmatprep.subr.mxu0 0.0
    %432 = vmatpush1.msra.mxu0 1.0
    %433 = vmatprep.subr.mxu0 0.0
    %434 = vmatpush1.msra.mxu0 1.0
    %435 = vmatprep.subr.mxu0 0.0
    %436 = vmatpush1.msra.mxu0 1.0
    %437 = vmatprep.subr.mxu0 0.0
    %438 = vmatpush1.msra.mxu0 1.0
    %439 = vmatprep.subr.mxu0 0.0
    %440 = vmatpush1.msra.mxu0 1.0
    %441 = vmatprep.subr.mxu0 0.0
    %442 = vmatpush1.msra.mxu0 1.0
    %443 = vmatprep.subr.mxu0 0.0
    %444 = vmatpush1.msra.mxu0 1.0
    %445 = vmatprep.subr.mxu0 0.0
    %446 = vmatpush1.msra.mxu0 1.0
    %447 = vmatprep.subr.mxu0 0.0
    %448 = vmatpush2.msra.mxu0 0.0
    %449 = vmatprep.subr.mxu0 0.0
    %450 = vmatpush2.msra.mxu0 0.0
    %451 = vmatprep.subr.mxu0 0.0
    %452 = vmatpush2.msra.mxu0 0.0
    %453 = vmatprep.subr.mxu0 0.0
    %454 = vmatpush2.msra.mxu0 0.0
    %455 = vmatprep.subr.mxu0 0.0
    %456 = vmatpush2.msra.mxu0 0.0
    %457 = vmatprep.subr.mxu0 0.0
    %458 = vmatpush2.msra.mxu0 0.0
    %459 = vmatprep.subr.mxu0 0.0
    %460 = vmatpush2.msra.mxu0 0.0
    %461 = vmatprep.subr.mxu0 0.0
    %462 = vmatpush2.msra.mxu0 0.0
    %463 = vmatprep.subr.mxu0 0.0
    %464 = vmatpush2.msra.mxu0 0.0
    %465 = vmatprep.subr.mxu0 0.0
    %466 = vmatpush2.msra.mxu0 0.0
    %467 = vmatprep.subr.mxu0 0.0
    %468 = vmatpush2.msra.mxu0 0.0
    %469 = vmatprep.subr.mxu0 0.0
    %470 = vmatpush2.msra.mxu0 0.0
    %471 = vmatprep.subr.mxu0 0.0
    %472 = vmatpush2.msra.mxu0 0.0
    %473 = vmatprep.subr.mxu0 0.0
    %474 = vmatpush2.msra.mxu0 0.0
    %475 = vmatprep.subr.mxu0 0.0
    %476 = vmatpush2.msra.mxu0 0.0
    %477 = vmatprep.subr.mxu0 0.0
    %478 = vmatpush2.msra.mxu0 0.0
    %479 = vmatprep.mubr.f32.mxu0 0.0
    %v480 = vand.u32 %v52, 4294901760
    %481 = vmatmul.mubr.f32.gmra.mxu0 %v480
    %v482 = vpop.f32.mrf.mxu0
    %v483 = vadd.f32 %v412, %v482
    %v484 = vpop.f32.mrf.mxu0
    %485 = vdwg.mxu0
    %v486 = vmul.f32 %v49, %v50
    %487 = vmatprep.subr.mxu0 0.0
    %488 = vmatpush1.msra.mxu0 1.0
    %489 = vmatprep.subr.mxu0 0.0
    %490 = vmatpush1.msra.mxu0 1.0
    %491 = vmatprep.subr.mxu0 0.0
    %492 = vmatpush1.msra.mxu0 1.0
    %493 = vmatprep.subr.mxu0 0.0
    %494 = vmatpush1.msra.mxu0 1.0
    %495 = vmatprep.subr.mxu0 0.0
    %496 = vmatpush1.msra.mxu0 1.0
    %497 = vmatprep.subr.mxu0 0.0
    %498 = vmatpush1.msra.mxu0 1.0
    %499 = vmatprep.subr.mxu0 0.0
    %500 = vmatpush1.msra.mxu0 1.0
    %501 = vmatprep.subr.mxu0 0.0
    %502 = vmatpush1.msra.mxu0 1.0
    %503 = vmatprep.subr.mxu0 0.0
    %504 = vmatpush1.msra.mxu0 1.0
    %505 = vmatprep.subr.mxu0 0.0
    %506 = vmatpush1.msra.mxu0 1.0
    %507 = vmatprep.subr.mxu0 0.0
    %508 = vmatpush1.msra.mxu0 1.0
    %509 = vmatprep.subr.mxu0 0.0
    %510 = vmatpush1.msra.mxu0 1.0
    %511 = vmatprep.subr.mxu0 0.0
    %512 = vmatpush1.msra.mxu0 1.0
    %513 = vmatprep.subr.mxu0 0.0
    %514 = vmatpush1.msra.mxu0 1.0
    %515 = vmatprep.subr.mxu0 0.0
    %516 = vmatpush1.msra.mxu0 1.0
    %517 = vmatprep.subr.mxu0 0.0
    %518 = vmatpush1.msra.mxu0 1.0
    %519 = vmatprep.subr.mxu0 0.0
    %520 = vmatpush2.msra.mxu0 0.0
    %521 = vmatprep.subr.mxu0 0.0
    %522 = vmatpush2.msra.mxu0 0.0
    %523 = vmatprep.subr.mxu0 0.0
    %524 = vmatpush2.msra.mxu0 0.0
    %525 = vmatprep.subr.mxu0 0.0
    %526 = vmatpush2.msra.mxu0 0.0
    %527 = vmatprep.subr.mxu0 0.0
    %528 = vmatpush2.msra.mxu0 0.0
    %529 = vmatprep.subr.mxu0 0.0
    %530 = vmatpush2.msra.mxu0 0.0
    %531 = vmatprep.subr.mxu0 0.0
    %532 = vmatpush2.msra.mxu0 0.0
    %533 = vmatprep.subr.mxu0 0.0
    %534 = vmatpush2.msra.mxu0 0.0
    %535 = vmatprep.subr.mxu0 0.0
    %536 = vmatpush2.msra.mxu0 0.0
    %537 = vmatprep.subr.mxu0 0.0
    %538 = vmatpush2.msra.mxu0 0.0
    %539 = vmatprep.subr.mxu0 0.0
    %540 = vmatpush2.msra.mxu0 0.0
    %541 = vmatprep.subr.mxu0 0.0
    %542 = vmatpush2.msra.mxu0 0.0
    %543 = vmatprep.subr.mxu0 0.0
    %544 = vmatpush2.msra.mxu0 0.0
    %545 = vmatprep.subr.mxu0 0.0
    %546 = vmatpush2.msra.mxu0 0.0
    %547 = vmatprep.subr.mxu0 0.0
    %548 = vmatpush2.msra.mxu0 0.0
    %549 = vmatprep.subr.mxu0 0.0
    %550 = vmatpush2.msra.mxu0 0.0
    %551 = vmatprep.mubr.f32.mxu0 0.0
    %v552 = vand.u32 %v486, 4294901760
    %v553 = vsub.f32 %v486, %v552
    %v554 = vand.u32 %v553, 4294901760
    %v555 = vsub.f32 %v553, %v554
    %v556 = vand.u32 %v555, 4294901760
    %557 = vmatmul.mubr.f32.gmra.mxu0 %v556
    %v558 = vpop.f32.mrf.mxu0
    %v559 = vadd.f32 0.0, %v558
    %v560 = vpop.f32.mrf.mxu0
    %561 = vdwg.mxu0
    %562 = vmatprep.subr.mxu0 0.0
    %563 = vmatpush1.msra.mxu0 0.0
    %564 = vmatprep.subr.mxu0 0.0
    %565 = vmatpush1.msra.mxu0 0.0
    %566 = vmatprep.subr.mxu0 0.0
    %567 = vmatpush1.msra.mxu0 0.0
    %568 = vmatprep.subr.mxu0 0.0
    %569 = vmatpush1.msra.mxu0 0.0
    %570 = vmatprep.subr.mxu0 0.0
    %571 = vmatpush1.msra.mxu0 0.0
    %572 = vmatprep.subr.mxu0 0.0
    %573 = vmatpush1.msra.mxu0 0.0
    %574 = vmatprep.subr.mxu0 0.0
    %575 = vmatpush1.msra.mxu0 0.0
    %576 = vmatprep.subr.mxu0 0.0
    %577 = vmatpush1.msra.mxu0 0.0
    %578 = vmatprep.subr.mxu0 0.0
    %579 = vmatpush1.msra.mxu0 0.0
    %580 = vmatprep.subr.mxu0 0.0
    %581 = vmatpush1.msra.mxu0 0.0
    %582 = vmatprep.subr.mxu0 0.0
    %583 = vmatpush1.msra.mxu0 0.0
    %584 = vmatprep.subr.mxu0 0.0
    %585 = vmatpush1.msra.mxu0 0.0
    %586 = vmatprep.subr.mxu0 0.0
    %587 = vmatpush1.msra.mxu0 0.0
    %588 = vmatprep.subr.mxu0 0.0
    %589 = vmatpush1.msra.mxu0 0.0
    %590 = vmatprep.subr.mxu0 0.0
    %591 = vmatpush1.msra.mxu0 0.0
    %592 = vmatprep.subr.mxu0 0.0
    %593 = vmatpush1.msra.mxu0 0.0
    %594 = vmatprep.subr.mxu0 0.0
    %595 = vmatpush2.msra.mxu0 0.0
    %596 = vmatprep.subr.mxu0 0.0
    %597 = vmatpush2.msra.mxu0 0.0
    %598 = vmatprep.subr.mxu0 0.0
    %599 = vmatpush2.msra.mxu0 0.0
    %600 = vmatprep.subr.mxu0 0.0
    %601 = vmatpush2.msra.mxu0 0.0
    %602 = vmatprep.subr.mxu0 0.0
    %603 = vmatpush2.msra.mxu0 0.0
    %604 = vmatprep.subr.mxu0 0.0
    %605 = vmatpush2.msra.mxu0 0.0
    %606 = vmatprep.subr.mxu0 0.0
    %607 = vmatpush2.msra.mxu0 0.0
    %608 = vmatprep.subr.mxu0 0.0
    %609 = vmatpush2.msra.mxu0 0.0
    %610 = vmatprep.subr.mxu0 0.0
    %611 = vmatpush2.msra.mxu0 0.0
    %612 = vmatprep.subr.mxu0 0.0
    %613 = vmatpush2.msra.mxu0 0.0
    %614 = vmatprep.subr.mxu0 0.0
    %615 = vmatpush2.msra.mxu0 0.0
    %616 = vmatprep.subr.mxu0 0.0
    %617 = vmatpush2.msra.mxu0 0.0
    %618 = vmatprep.subr.mxu0 0.0
    %619 = vmatpush2.msra.mxu0 0.0
    %620 = vmatprep.subr.mxu0 0.0
    %621 = vmatpush2.msra.mxu0 0.0
    %622 = vmatprep.subr.mxu0 0.0
    %623 = vmatpush2.msra.mxu0 0.0
    %624 = vmatprep.subr.mxu0 0.0
    %625 = vmatpush2.msra.mxu0 0.0
    %626 = vmatprep.mubr.f32.mxu0 0.0
    %v627 = vand.u32 %v486, 4294901760
    %628 = vmatmul.mubr.f32.gmra.mxu0 %v627
    %v629 = vpop.f32.mrf.mxu0
    %v630 = vadd.f32 %v559, %v629
    %v631 = vpop.f32.mrf.mxu0
    %632 = vdwg.mxu0
    %633 = vmatprep.subr.mxu0 0.0
    %634 = vmatpush1.msra.mxu0 0.0
    %635 = vmatprep.subr.mxu0 0.0
    %636 = vmatpush1.msra.mxu0 0.0
    %637 = vmatprep.subr.mxu0 0.0
    %638 = vmatpush1.msra.mxu0 0.0
    %639 = vmatprep.subr.mxu0 0.0
    %640 = vmatpush1.msra.mxu0 0.0
    %641 = vmatprep.subr.mxu0 0.0
    %642 = vmatpush1.msra.mxu0 0.0
    %643 = vmatprep.subr.mxu0 0.0
    %644 = vmatpush1.msra.mxu0 0.0
    %645 = vmatprep.subr.mxu0 0.0
    %646 = vmatpush1.msra.mxu0 0.0
    %647 = vmatprep.subr.mxu0 0.0
    %648 = vmatpush1.msra.mxu0 0.0
    %649 = vmatprep.subr.mxu0 0.0
    %650 = vmatpush1.msra.mxu0 0.0
    %651 = vmatprep.subr.mxu0 0.0
    %652 = vmatpush1.msra.mxu0 0.0
    %653 = vmatprep.subr.mxu0 0.0
    %654 = vmatpush1.msra.mxu0 0.0
    %655 = vmatprep.subr.mxu0 0.0
    %656 = vmatpush1.msra.mxu0 0.0
    %657 = vmatprep.subr.mxu0 0.0
    %658 = vmatpush1.msra.mxu0 0.0
    %659 = vmatprep.subr.mxu0 0.0
    %660 = vmatpush1.msra.mxu0 0.0
    %661 = vmatprep.subr.mxu0 0.0
    %662 = vmatpush1.msra.mxu0 0.0
    %663 = vmatprep.subr.mxu0 0.0
    %664 = vmatpush1.msra.mxu0 0.0
    %665 = vmatprep.subr.mxu0 0.0
    %666 = vmatpush2.msra.mxu0 0.0
    %667 = vmatprep.subr.mxu0 0.0
    %668 = vmatpush2.msra.mxu0 0.0
    %669 = vmatprep.subr.mxu0 0.0
    %670 = vmatpush2.msra.mxu0 0.0
    %671 = vmatprep.subr.mxu0 0.0
    %672 = vmatpush2.msra.mxu0 0.0
    %673 = vmatprep.subr.mxu0 0.0
    %674 = vmatpush2.msra.mxu0 0.0
    %675 = vmatprep.subr.mxu0 0.0
    %676 = vmatpush2.msra.mxu0 0.0
    %677 = vmatprep.subr.mxu0 0.0
    %678 = vmatpush2.msra.mxu0 0.0
    %679 = vmatprep.subr.mxu0 0.0
    %680 = vmatpush2.msra.mxu0 0.0
    %681 = vmatprep.subr.mxu0 0.0
    %682 = vmatpush2.msra.mxu0 0.0
    %683 = vmatprep.subr.mxu0 0.0
    %684 = vmatpush2.msra.mxu0 0.0
    %685 = vmatprep.subr.mxu0 0.0
    %686 = vmatpush2.msra.mxu0 0.0
    %687 = vmatprep.subr.mxu0 0.0
    %688 = vmatpush2.msra.mxu0 0.0
    %689 = vmatprep.subr.mxu0 0.0
    %690 = vmatpush2.msra.mxu0 0.0
    %691 = vmatprep.subr.mxu0 0.0
    %692 = vmatpush2.msra.mxu0 0.0
    %693 = vmatprep.subr.mxu0 0.0
    %694 = vmatpush2.msra.mxu0 0.0
    %695 = vmatprep.subr.mxu0 0.0
    %696 = vmatpush2.msra.mxu0 0.0
    %697 = vmatprep.mubr.f32.mxu0 0.0
    %v698 = vand.u32 %v486, 4294901760
    %v699 = vsub.f32 %v486, %v698
    %700 = vmatmul.mubr.f32.gmra.mxu0 %v699
    %v701 = vpop.f32.mrf.mxu0
    %v702 = vadd.f32 %v630, %v701
    %v703 = vpop.f32.mrf.mxu0
    %704 = vdwg.mxu0
    %705 = vmatprep.subr.mxu0 0.0
    %706 = vmatpush1.msra.mxu0 1.0
    %707 = vmatprep.subr.mxu0 0.0
    %708 = vmatpush1.msra.mxu0 1.0
    %709 = vmatprep.subr.mxu0 0.0
    %710 = vmatpush1.msra.mxu0 1.0
    %711 = vmatprep.subr.mxu0 0.0
    %712 = vmatpush1.msra.mxu0 1.0
    %713 = vmatprep.subr.mxu0 0.0
    %714 = vmatpush1.msra.mxu0 1.0
    %715 = vmatprep.subr.mxu0 0.0
    %716 = vmatpush1.msra.mxu0 1.0
    %717 = vmatprep.subr.mxu0 0.0
    %718 = vmatpush1.msra.mxu0 1.0
    %719 = vmatprep.subr.mxu0 0.0
    %720 = vmatpush1.msra.mxu0 1.0
    %721 = vmatprep.subr.mxu0 0.0
    %722 = vmatpush1.msra.mxu0 1.0
    %723 = vmatprep.subr.mxu0 0.0
    %724 = vmatpush1.msra.mxu0 1.0
    %725 = vmatprep.subr.mxu0 0.0
    %726 = vmatpush1.msra.mxu0 1.0
    %727 = vmatprep.subr.mxu0 0.0
    %728 = vmatpush1.msra.mxu0 1.0
    %729 = vmatprep.subr.mxu0 0.0
    %730 = vmatpush1.msra.mxu0 1.0
    %731 = vmatprep.subr.mxu0 0.0
    %732 = vmatpush1.msra.mxu0 1.0
    %733 = vmatprep.subr.mxu0 0.0
    %734 = vmatpush1.msra.mxu0 1.0
    %735 = vmatprep.subr.mxu0 0.0
    %736 = vmatpush1.msra.mxu0 1.0
    %737 = vmatprep.subr.mxu0 0.0
    %738 = vmatpush2.msra.mxu0 0.0
    %739 = vmatprep.subr.mxu0 0.0
    %740 = vmatpush2.msra.mxu0 0.0
    %741 = vmatprep.subr.mxu0 0.0
    %742 = vmatpush2.msra.mxu0 0.0
    %743 = vmatprep.subr.mxu0 0.0
    %744 = vmatpush2.msra.mxu0 0.0
    %745 = vmatprep.subr.mxu0 0.0
    %746 = vmatpush2.msra.mxu0 0.0
    %747 = vmatprep.subr.mxu0 0.0
    %748 = vmatpush2.msra.mxu0 0.0
    %749 = vmatprep.subr.mxu0 0.0
    %750 = vmatpush2.msra.mxu0 0.0
    %751 = vmatprep.subr.mxu0 0.0
    %752 = vmatpush2.msra.mxu0 0.0
    %753 = vmatprep.subr.mxu0 0.0
    %754 = vmatpush2.msra.mxu0 0.0
    %755 = vmatprep.subr.mxu0 0.0
    %756 = vmatpush2.msra.mxu0 0.0
    %757 = vmatprep.subr.mxu0 0.0
    %758 = vmatpush2.msra.mxu0 0.0
    %759 = vmatprep.subr.mxu0 0.0
    %760 = vmatpush2.msra.mxu0 0.0
    %761 = vmatprep.subr.mxu0 0.0
    %762 = vmatpush2.msra.mxu0 0.0
    %763 = vmatprep.subr.mxu0 0.0
    %764 = vmatpush2.msra.mxu0 0.0
    %765 = vmatprep.subr.mxu0 0.0
    %766 = vmatpush2.msra.mxu0 0.0
    %767 = vmatprep.subr.mxu0 0.0
    %768 = vmatpush2.msra.mxu0 0.0
    %769 = vmatprep.mubr.f32.mxu0 0.0
    %v770 = vand.u32 %v486, 4294901760
    %v771 = vsub.f32 %v486, %v770
    %v772 = vand.u32 %v771, 4294901760
    %773 = vmatmul.mubr.f32.gmra.mxu0 %v772
    %v774 = vpop.f32.mrf.mxu0
    %v775 = vadd.f32 %v702, %v774
    %v776 = vpop.f32.mrf.mxu0
    %777 = vdwg.mxu0
    %778 = vmatprep.subr.mxu0 0.0
    %779 = vmatpush1.msra.mxu0 0.0
    %780 = vmatprep.subr.mxu0 0.0
    %781 = vmatpush1.msra.mxu0 0.0
    %782 = vmatprep.subr.mxu0 0.0
    %783 = vmatpush1.msra.mxu0 0.0
    %784 = vmatprep.subr.mxu0 0.0
    %785 = vmatpush1.msra.mxu0 0.0
    %786 = vmatprep.subr.mxu0 0.0
    %787 = vmatpush1.msra.mxu0 0.0
    %788 = vmatprep.subr.mxu0 0.0
    %789 = vmatpush1.msra.mxu0 0.0
    %790 = vmatprep.subr.mxu0 0.0
    %791 = vmatpush1.msra.mxu0 0.0
    %792 = vmatprep.subr.mxu0 0.0
    %793 = vmatpush1.msra.mxu0 0.0
    %794 = vmatprep.subr.mxu0 0.0
    %795 = vmatpush1.msra.mxu0 0.0
    %796 = vmatprep.subr.mxu0 0.0
    %797 = vmatpush1.msra.mxu0 0.0
    %798 = vmatprep.subr.mxu0 0.0
    %799 = vmatpush1.msra.mxu0 0.0
    %800 = vmatprep.subr.mxu0 0.0
    %801 = vmatpush1.msra.mxu0 0.0
    %802 = vmatprep.subr.mxu0 0.0
    %803 = vmatpush1.msra.mxu0 0.0
    %804 = vmatprep.subr.mxu0 0.0
    %805 = vmatpush1.msra.mxu0 0.0
    %806 = vmatprep.subr.mxu0 0.0
    %807 = vmatpush1.msra.mxu0 0.0
    %808 = vmatprep.subr.mxu0 0.0
    %809 = vmatpush1.msra.mxu0 0.0
    %810 = vmatprep.subr.mxu0 0.0
    %811 = vmatpush2.msra.mxu0 0.0
    %812 = vmatprep.subr.mxu0 0.0
    %813 = vmatpush2.msra.mxu0 0.0
    %814 = vmatprep.subr.mxu0 0.0
    %815 = vmatpush2.msra.mxu0 0.0
    %816 = vmatprep.subr.mxu0 0.0
    %817 = vmatpush2.msra.mxu0 0.0
    %818 = vmatprep.subr.mxu0 0.0
    %819 = vmatpush2.msra.mxu0 0.0
    %820 = vmatprep.subr.mxu0 0.0
    %821 = vmatpush2.msra.mxu0 0.0
    %822 = vmatprep.subr.mxu0 0.0
    %823 = vmatpush2.msra.mxu0 0.0
    %824 = vmatprep.subr.mxu0 0.0
    %825 = vmatpush2.msra.mxu0 0.0
    %826 = vmatprep.subr.mxu0 0.0
    %827 = vmatpush2.msra.mxu0 0.0
    %828 = vmatprep.subr.mxu0 0.0
    %829 = vmatpush2.msra.mxu0 0.0
    %830 = vmatprep.subr.mxu0 0.0
    %831 = vmatpush2.msra.mxu0 0.0
    %832 = vmatprep.subr.mxu0 0.0
    %833 = vmatpush2.msra.mxu0 0.0
    %834 = vmatprep.subr.mxu0 0.0
    %835 = vmatpush2.msra.mxu0 0.0
    %836 = vmatprep.subr.mxu0 0.0
    %837 = vmatpush2.msra.mxu0 0.0
    %838 = vmatprep.subr.mxu0 0.0
    %839 = vmatpush2.msra.mxu0 0.0
    %840 = vmatprep.subr.mxu0 0.0
    %841 = vmatpush2.msra.mxu0 0.0
    %842 = vmatprep.mubr.f32.mxu0 0.0
    %v843 = vand.u32 %v486, 4294901760
    %844 = vmatmul.mubr.f32.gmra.mxu0 %v843
    %v845 = vpop.f32.mrf.mxu0
    %v846 = vadd.f32 %v775, %v845
    %v847 = vpop.f32.mrf.mxu0
    %848 = vdwg.mxu0
    %849 = vmatprep.subr.mxu0 0.0
    %850 = vmatpush1.msra.mxu0 1.0
    %851 = vmatprep.subr.mxu0 0.0
    %852 = vmatpush1.msra.mxu0 1.0
    %853 = vmatprep.subr.mxu0 0.0
    %854 = vmatpush1.msra.mxu0 1.0
    %855 = vmatprep.subr.mxu0 0.0
    %856 = vmatpush1.msra.mxu0 1.0
    %857 = vmatprep.subr.mxu0 0.0
    %858 = vmatpush1.msra.mxu0 1.0
    %859 = vmatprep.subr.mxu0 0.0
    %860 = vmatpush1.msra.mxu0 1.0
    %861 = vmatprep.subr.mxu0 0.0
    %862 = vmatpush1.msra.mxu0 1.0
    %863 = vmatprep.subr.mxu0 0.0
    %864 = vmatpush1.msra.mxu0 1.0
    %865 = vmatprep.subr.mxu0 0.0
    %866 = vmatpush1.msra.mxu0 1.0
    %867 = vmatprep.subr.mxu0 0.0
    %868 = vmatpush1.msra.mxu0 1.0
    %869 = vmatprep.subr.mxu0 0.0
    %870 = vmatpush1.msra.mxu0 1.0
    %871 = vmatprep.subr.mxu0 0.0
    %872 = vmatpush1.msra.mxu0 1.0
    %873 = vmatprep.subr.mxu0 0.0
    %874 = vmatpush1.msra.mxu0 1.0
    %875 = vmatprep.subr.mxu0 0.0
    %876 = vmatpush1.msra.mxu0 1.0
    %877 = vmatprep.subr.mxu0 0.0
    %878 = vmatpush1.msra.mxu0 1.0
    %879 = vmatprep.subr.mxu0 0.0
    %880 = vmatpush1.msra.mxu0 1.0
    %881 = vmatprep.subr.mxu0 0.0
    %882 = vmatpush2.msra.mxu0 0.0
    %883 = vmatprep.subr.mxu0 0.0
    %884 = vmatpush2.msra.mxu0 0.0
    %885 = vmatprep.subr.mxu0 0.0
    %886 = vmatpush2.msra.mxu0 0.0
    %887 = vmatprep.subr.mxu0 0.0
    %888 = vmatpush2.msra.mxu0 0.0
    %889 = vmatprep.subr.mxu0 0.0
    %890 = vmatpush2.msra.mxu0 0.0
    %891 = vmatprep.subr.mxu0 0.0
    %892 = vmatpush2.msra.mxu0 0.0
    %893 = vmatprep.subr.mxu0 0.0
    %894 = vmatpush2.msra.mxu0 0.0
    %895 = vmatprep.subr.mxu0 0.0
    %896 = vmatpush2.msra.mxu0 0.0
    %897 = vmatprep.subr.mxu0 0.0
    %898 = vmatpush2.msra.mxu0 0.0
    %899 = vmatprep.subr.mxu0 0.0
    %900 = vmatpush2.msra.mxu0 0.0
    %901 = vmatprep.subr.mxu0 0.0
    %902 = vmatpush2.msra.mxu0 0.0
    %903 = vmatprep.subr.mxu0 0.0
    %904 = vmatpush2.msra.mxu0 0.0
    %905 = vmatprep.subr.mxu0 0.0
    %906 = vmatpush2.msra.mxu0 0.0
    %907 = vmatprep.subr.mxu0 0.0
    %908 = vmatpush2.msra.mxu0 0.0
    %909 = vmatprep.subr.mxu0 0.0
    %910 = vmatpush2.msra.mxu0 0.0
    %911 = vmatprep.subr.mxu0 0.0
    %912 = vmatpush2.msra.mxu0 0.0
    %913 = vmatprep.mubr.f32.mxu0 0.0
    %v914 = vand.u32 %v486, 4294901760
    %915 = vmatmul.mubr.f32.gmra.mxu0 %v914
    %v916 = vpop.f32.mrf.mxu0
    %v917 = vadd.f32 %v846, %v916
    %v918 = vpop.f32.mrf.mxu0
    %919 = vdwg.mxu0
    %v920 = vmul.f32 %v50, %v50
    %921 = vmatprep.subr.mxu0 0.0
    %922 = vmatpush1.msra.mxu0 1.0
    %923 = vmatprep.subr.mxu0 0.0
    %924 = vmatpush1.msra.mxu0 1.0
    %925 = vmatprep.subr.mxu0 0.0
    %926 = vmatpush1.msra.mxu0 1.0
    %927 = vmatprep.subr.mxu0 0.0
    %928 = vmatpush1.msra.mxu0 1.0
    %929 = vmatprep.subr.mxu0 0.0
    %930 = vmatpush1.msra.mxu0 1.0
    %931 = vmatprep.subr.mxu0 0.0
    %932 = vmatpush1.msra.mxu0 1.0
    %933 = vmatprep.subr.mxu0 0.0
    %934 = vmatpush1.msra.mxu0 1.0
    %935 = vmatprep.subr.mxu0 0.0
    %936 = vmatpush1.msra.mxu0 1.0
    %937 = vmatprep.subr.mxu0 0.0
    %938 = vmatpush1.msra.mxu0 1.0
    %939 = vmatprep.subr.mxu0 0.0
    %940 = vmatpush1.msra.mxu0 1.0
    %941 = vmatprep.subr.mxu0 0.0
    %942 = vmatpush1.msra.mxu0 1.0
    %943 = vmatprep.subr.mxu0 0.0
    %944 = vmatpush1.msra.mxu0 1.0
    %945 = vmatprep.subr.mxu0 0.0
    %946 = vmatpush1.msra.mxu0 1.0
    %947 = vmatprep.subr.mxu0 0.0
    %948 = vmatpush1.msra.mxu0 1.0
    %949 = vmatprep.subr.mxu0 0.0
    %950 = vmatpush1.msra.mxu0 1.0
    %951 = vmatprep.subr.mxu0 0.0
    %952 = vmatpush1.msra.mxu0 1.0
    %953 = vmatprep.subr.mxu0 0.0
    %954 = vmatpush2.msra.mxu0 0.0
    %955 = vmatprep.subr.mxu0 0.0
    %956 = vmatpush2.msra.mxu0 0.0
    %957 = vmatprep.subr.mxu0 0.0
    %958 = vmatpush2.msra.mxu0 0.0
    %959 = vmatprep.subr.mxu0 0.0
    %960 = vmatpush2.msra.mxu0 0.0
    %961 = vmatprep.subr.mxu0 0.0
    %962 = vmatpush2.msra.mxu0 0.0
    %963 = vmatprep.subr.mxu0 0.0
    %964 = vmatpush2.msra.mxu0 0.0
    %965 = vmatprep.subr.mxu0 0.0
    %966 = vmatpush2.msra.mxu0 0.0
    %967 = vmatprep.subr.mxu0 0.0
    %968 = vmatpush2.msra.mxu0 0.0
    %969 = vmatprep.subr.mxu0 0.0
    %970 = vmatpush2.msra.mxu0 0.0
    %971 = vmatprep.subr.mxu0 0.0
    %972 = vmatpush2.msra.mxu0 0.0
    %973 = vmatprep.subr.mxu0 0.0
    %974 = vmatpush2.msra.mxu0 0.0
    %975 = vmatprep.subr.mxu0 0.0
    %976 = vmatpush2.msra.mxu0 0.0
    %977 = vmatprep.subr.mxu0 0.0
    %978 = vmatpush2.msra.mxu0 0.0
    %979 = vmatprep.subr.mxu0 0.0
    %980 = vmatpush2.msra.mxu0 0.0
    %981 = vmatprep.subr.mxu0 0.0
    %982 = vmatpush2.msra.mxu0 0.0
    %983 = vmatprep.subr.mxu0 0.0
    %984 = vmatpush2.msra.mxu0 0.0
    %985 = vmatprep.mubr.f32.mxu0 0.0
    %v986 = vand.u32 %v920, 4294901760
    %v987 = vsub.f32 %v920, %v986
    %v988 = vand.u32 %v987, 4294901760
    %v989 = vsub.f32 %v987, %v988
    %v990 = vand.u32 %v989, 4294901760
    %991 = vmatmul.mubr.f32.gmra.mxu0 %v990
    %v992 = vpop.f32.mrf.mxu0
    %v993 = vadd.f32 0.0, %v992
    %v994 = vpop.f32.mrf.mxu0
    %995 = vdwg.mxu0
    %996 = vmatprep.subr.mxu0 0.0
    %997 = vmatpush1.msra.mxu0 0.0
    %998 = vmatprep.subr.mxu0 0.0
    %999 = vmatpush1.msra.mxu0 0.0
    %1000 = vmatprep.subr.mxu0 0.0
    %1001 = vmatpush1.msra.mxu0 0.0
    %1002 = vmatprep.subr.mxu0 0.0
    %1003 = vmatpush1.msra.mxu0 0.0
    %1004 = vmatprep.subr.mxu0 0.0
    %1005 = vmatpush1.msra.mxu0 0.0
    %1006 = vmatprep.subr.mxu0 0.0
    %1007 = vmatpush1.msra.mxu0 0.0
    %1008 = vmatprep.subr.mxu0 0.0
    %1009 = vmatpush1.msra.mxu0 0.0
    %1010 = vmatprep.subr.mxu0 0.0
    %1011 = vmatpush1.msra.mxu0 0.0
    %1012 = vmatprep.subr.mxu0 0.0
    %1013 = vmatpush1.msra.mxu0 0.0
    %1014 = vmatprep.subr.mxu0 0.0
    %1015 = vmatpush1.msra.mxu0 0.0
    %1016 = vmatprep.subr.mxu0 0.0
    %1017 = vmatpush1.msra.mxu0 0.0
    %1018 = vmatprep.subr.mxu0 0.0
    %1019 = vmatpush1.msra.mxu0 0.0
    %1020 = vmatprep.subr.mxu0 0.0
    %1021 = vmatpush1.msra.mxu0 0.0
    %1022 = vmatprep.subr.mxu0 0.0
    %1023 = vmatpush1.msra.mxu0 0.0
    %1024 = vmatprep.subr.mxu0 0.0
    %1025 = vmatpush1.msra.mxu0 0.0
    %1026 = vmatprep.subr.mxu0 0.0
    %1027 = vmatpush1.msra.mxu0 0.0
    %1028 = vmatprep.subr.mxu0 0.0
    %1029 = vmatpush2.msra.mxu0 0.0
    %1030 = vmatprep.subr.mxu0 0.0
    %1031 = vmatpush2.msra.mxu0 0.0
    %1032 = vmatprep.subr.mxu0 0.0
    %1033 = vmatpush2.msra.mxu0 0.0
    %1034 = vmatprep.subr.mxu0 0.0
    %1035 = vmatpush2.msra.mxu0 0.0
    %1036 = vmatprep.subr.mxu0 0.0
    %1037 = vmatpush2.msra.mxu0 0.0
    %1038 = vmatprep.subr.mxu0 0.0
    %1039 = vmatpush2.msra.mxu0 0.0
    %1040 = vmatprep.subr.mxu0 0.0
    %1041 = vmatpush2.msra.mxu0 0.0
    %1042 = vmatprep.subr.mxu0 0.0
    %1043 = vmatpush2.msra.mxu0 0.0
    %1044 = vmatprep.subr.mxu0 0.0
    %1045 = vmatpush2.msra.mxu0 0.0
    %1046 = vmatprep.subr.mxu0 0.0
    %1047 = vmatpush2.msra.mxu0 0.0
    %1048 = vmatprep.subr.mxu0 0.0
    %1049 = vmatpush2.msra.mxu0 0.0
    %1050 = vmatprep.subr.mxu0 0.0
    %1051 = vmatpush2.msra.mxu0 0.0
    %1052 = vmatprep.subr.mxu0 0.0
    %1053 = vmatpush2.msra.mxu0 0.0
    %1054 = vmatprep.subr.mxu0 0.0
    %1055 = vmatpush2.msra.mxu0 0.0
    %1056 = vmatprep.subr.mxu0 0.0
    %1057 = vmatpush2.msra.mxu0 0.0
    %1058 = vmatprep.subr.mxu0 0.0
    %1059 = vmatpush2.msra.mxu0 0.0
    %1060 = vmatprep.mubr.f32.mxu0 0.0
    %v1061 = vand.u32 %v920, 4294901760
    %1062 = vmatmul.mubr.f32.gmra.mxu0 %v1061
    %v1063 = vpop.f32.mrf.mxu0
    %v1064 = vadd.f32 %v993, %v1063
    %v1065 = vpop.f32.mrf.mxu0
    %1066 = vdwg.mxu0
    %1067 = vmatprep.subr.mxu0 0.0
    %1068 = vmatpush1.msra.mxu0 0.0
    %1069 = vmatprep.subr.mxu0 0.0
    %1070 = vmatpush1.msra.mxu0 0.0
    %1071 = vmatprep.subr.mxu0 0.0
    %1072 = vmatpush1.msra.mxu0 0.0
    %1073 = vmatprep.subr.mxu0 0.0
    %1074 = vmatpush1.msra.mxu0 0.0
    %1075 = vmatprep.subr.mxu0 0.0
    %1076 = vmatpush1.msra.mxu0 0.0
    %1077 = vmatprep.subr.mxu0 0.0
    %1078 = vmatpush1.msra.mxu0 0.0
    %1079 = vmatprep.subr.mxu0 0.0
    %1080 = vmatpush1.msra.mxu0 0.0
    %1081 = vmatprep.subr.mxu0 0.0
    %1082 = vmatpush1.msra.mxu0 0.0
    %1083 = vmatprep.subr.mxu0 0.0
    %1084 = vmatpush1.msra.mxu0 0.0
    %1085 = vmatprep.subr.mxu0 0.0
    %1086 = vmatpush1.msra.mxu0 0.0
    %1087 = vmatprep.subr.mxu0 0.0
    %1088 = vmatpush1.msra.mxu0 0.0
    %1089 = vmatprep.subr.mxu0 0.0
    %1090 = vmatpush1.msra.mxu0 0.0
    %1091 = vmatprep.subr.mxu0 0.0
    %1092 = vmatpush1.msra.mxu0 0.0
    %1093 = vmatprep.subr.mxu0 0.0
    %1094 = vmatpush1.msra.mxu0 0.0
    %1095 = vmatprep.subr.mxu0 0.0
    %1096 = vmatpush1.msra.mxu0 0.0
    %1097 = vmatprep.subr.mxu0 0.0
    %1098 = vmatpush1.msra.mxu0 0.0
    %1099 = vmatprep.subr.mxu0 0.0
    %1100 = vmatpush2.msra.mxu0 0.0
    %1101 = vmatprep.subr.mxu0 0.0
    %1102 = vmatpush2.msra.mxu0 0.0
    %1103 = vmatprep.subr.mxu0 0.0
    %1104 = vmatpush2.msra.mxu0 0.0
    %1105 = vmatprep.subr.mxu0 0.0
    %1106 = vmatpush2.msra.mxu0 0.0
    %1107 = vmatprep.subr.mxu0 0.0
    %1108 = vmatpush2.msra.mxu0 0.0
    %1109 = vmatprep.subr.mxu0 0.0
    %1110 = vmatpush2.msra.mxu0 0.0
    %1111 = vmatprep.subr.mxu0 0.0
    %1112 = vmatpush2.msra.mxu0 0.0
    %1113 = vmatprep.subr.mxu0 0.0
    %1114 = vmatpush2.msra.mxu0 0.0
    %1115 = vmatprep.subr.mxu0 0.0
    %1116 = vmatpush2.msra.mxu0 0.0
    %1117 = vmatprep.subr.mxu0 0.0
    %1118 = vmatpush2.msra.mxu0 0.0
    %1119 = vmatprep.subr.mxu0 0.0
    %1120 = vmatpush2.msra.mxu0 0.0
    %1121 = vmatprep.subr.mxu0 0.0
    %1122 = vmatpush2.msra.mxu0 0.0
    %1123 = vmatprep.subr.mxu0 0.0
    %1124 = vmatpush2.msra.mxu0 0.0
    %1125 = vmatprep.subr.mxu0 0.0
    %1126 = vmatpush2.msra.mxu0 0.0
    %1127 = vmatprep.subr.mxu0 0.0
    %1128 = vmatpush2.msra.mxu0 0.0
    %1129 = vmatprep.subr.mxu0 0.0
    %1130 = vmatpush2.msra.mxu0 0.0
    %1131 = vmatprep.mubr.f32.mxu0 0.0
    %v1132 = vand.u32 %v920, 4294901760
    %v1133 = vsub.f32 %v920, %v1132
    %1134 = vmatmul.mubr.f32.gmra.mxu0 %v1133
    %v1135 = vpop.f32.mrf.mxu0
    %v1136 = vadd.f32 %v1064, %v1135
    %v1137 = vpop.f32.mrf.mxu0
    %1138 = vdwg.mxu0
    %1139 = vmatprep.subr.mxu0 0.0
    %1140 = vmatpush1.msra.mxu0 1.0
    %1141 = vmatprep.subr.mxu0 0.0
    %1142 = vmatpush1.msra.mxu0 1.0
    %1143 = vmatprep.subr.mxu0 0.0
    %1144 = vmatpush1.msra.mxu0 1.0
    %1145 = vmatprep.subr.mxu0 0.0
    %1146 = vmatpush1.msra.mxu0 1.0
    %1147 = vmatprep.subr.mxu0 0.0
    %1148 = vmatpush1.msra.mxu0 1.0
    %1149 = vmatprep.subr.mxu0 0.0
    %1150 = vmatpush1.msra.mxu0 1.0
    %1151 = vmatprep.subr.mxu0 0.0
    %1152 = vmatpush1.msra.mxu0 1.0
    %1153 = vmatprep.subr.mxu0 0.0
    %1154 = vmatpush1.msra.mxu0 1.0
    %1155 = vmatprep.subr.mxu0 0.0
    %1156 = vmatpush1.msra.mxu0 1.0
    %1157 = vmatprep.subr.mxu0 0.0
    %1158 = vmatpush1.msra.mxu0 1.0
    %1159 = vmatprep.subr.mxu0 0.0
    %1160 = vmatpush1.msra.mxu0 1.0
    %1161 = vmatprep.subr.mxu0 0.0
    %1162 = vmatpush1.msra.mxu0 1.0
    %1163 = vmatprep.subr.mxu0 0.0
    %1164 = vmatpush1.msra.mxu0 1.0
    %1165 = vmatprep.subr.mxu0 0.0
    %1166 = vmatpush1.msra.mxu0 1.0
    %1167 = vmatprep.subr.mxu0 0.0
    %1168 = vmatpush1.msra.mxu0 1.0
    %1169 = vmatprep.subr.mxu0 0.0
    %1170 = vmatpush1.msra.mxu0 1.0
    %1171 = vmatprep.subr.mxu0 0.0
    %1172 = vmatpush2.msra.mxu0 0.0
    %1173 = vmatprep.subr.mxu0 0.0
    %1174 = vmatpush2.msra.mxu0 0.0
    %1175 = vmatprep.subr.mxu0 0.0
    %1176 = vmatpush2.msra.mxu0 0.0
    %1177 = vmatprep.subr.mxu0 0.0
    %1178 = vmatpush2.msra.mxu0 0.0
    %1179 = vmatprep.subr.mxu0 0.0
    %1180 = vmatpush2.msra.mxu0 0.0
    %1181 = vmatprep.subr.mxu0 0.0
    %1182 = vmatpush2.msra.mxu0 0.0
    %1183 = vmatprep.subr.mxu0 0.0
    %1184 = vmatpush2.msra.mxu0 0.0
    %1185 = vmatprep.subr.mxu0 0.0
    %1186 = vmatpush2.msra.mxu0 0.0
    %1187 = vmatprep.subr.mxu0 0.0
    %1188 = vmatpush2.msra.mxu0 0.0
    %1189 = vmatprep.subr.mxu0 0.0
    %1190 = vmatpush2.msra.mxu0 0.0
    %1191 = vmatprep.subr.mxu0 0.0
    %1192 = vmatpush2.msra.mxu0 0.0
    %1193 = vmatprep.subr.mxu0 0.0
    %1194 = vmatpush2.msra.mxu0 0.0
    %1195 = vmatprep.subr.mxu0 0.0
    %1196 = vmatpush2.msra.mxu0 0.0
    %1197 = vmatprep.subr.mxu0 0.0
    %1198 = vmatpush2.msra.mxu0 0.0
    %1199 = vmatprep.subr.mxu0 0.0
    %1200 = vmatpush2.msra.mxu0 0.0
    %1201 = vmatprep.subr.mxu0 0.0
    %1202 = vmatpush2.msra.mxu0 0.0
    %1203 = vmatprep.mubr.f32.mxu0 0.0
    %v1204 = vand.u32 %v920, 4294901760
    %v1205 = vsub.f32 %v920, %v1204
    %v1206 = vand.u32 %v1205, 4294901760
    %1207 = vmatmul.mubr.f32.gmra.mxu0 %v1206
    %v1208 = vpop.f32.mrf.mxu0
    %v1209 = vadd.f32 %v1136, %v1208
    %v1210 = vpop.f32.mrf.mxu0
    %1211 = vdwg.mxu0
    %1212 = vmatprep.subr.mxu0 0.0
    %1213 = vmatpush1.msra.mxu0 0.0
    %1214 = vmatprep.subr.mxu0 0.0
    %1215 = vmatpush1.msra.mxu0 0.0
    %1216 = vmatprep.subr.mxu0 0.0
    %1217 = vmatpush1.msra.mxu0 0.0
    %1218 = vmatprep.subr.mxu0 0.0
    %1219 = vmatpush1.msra.mxu0 0.0
    %1220 = vmatprep.subr.mxu0 0.0
    %1221 = vmatpush1.msra.mxu0 0.0
    %1222 = vmatprep.subr.mxu0 0.0
    %1223 = vmatpush1.msra.mxu0 0.0
    %1224 = vmatprep.subr.mxu0 0.0
    %1225 = vmatpush1.msra.mxu0 0.0
    %1226 = vmatprep.subr.mxu0 0.0
    %1227 = vmatpush1.msra.mxu0 0.0
    %1228 = vmatprep.subr.mxu0 0.0
    %1229 = vmatpush1.msra.mxu0 0.0
    %1230 = vmatprep.subr.mxu0 0.0
    %1231 = vmatpush1.msra.mxu0 0.0
    %1232 = vmatprep.subr.mxu0 0.0
    %1233 = vmatpush1.msra.mxu0 0.0
    %1234 = vmatprep.subr.mxu0 0.0
    %1235 = vmatpush1.msra.mxu0 0.0
    %1236 = vmatprep.subr.mxu0 0.0
    %1237 = vmatpush1.msra.mxu0 0.0
    %1238 = vmatprep.subr.mxu0 0.0
    %1239 = vmatpush1.msra.mxu0 0.0
    %1240 = vmatprep.subr.mxu0 0.0
    %1241 = vmatpush1.msra.mxu0 0.0
    %1242 = vmatprep.subr.mxu0 0.0
    %1243 = vmatpush1.msra.mxu0 0.0
    %1244 = vmatprep.subr.mxu0 0.0
    %1245 = vmatpush2.msra.mxu0 0.0
    %1246 = vmatprep.subr.mxu0 0.0
    %1247 = vmatpush2.msra.mxu0 0.0
    %1248 = vmatprep.subr.mxu0 0.0
    %1249 = vmatpush2.msra.mxu0 0.0
    %1250 = vmatprep.subr.mxu0 0.0
    %1251 = vmatpush2.msra.mxu0 0.0
    %1252 = vmatprep.subr.mxu0 0.0
    %1253 = vmatpush2.msra.mxu0 0.0
    %1254 = vmatprep.subr.mxu0 0.0
    %1255 = vmatpush2.msra.mxu0 0.0
    %1256 = vmatprep.subr.mxu0 0.0
    %1257 = vmatpush2.msra.mxu0 0.0
    %1258 = vmatprep.subr.mxu0 0.0
    %1259 = vmatpush2.msra.mxu0 0.0
    %1260 = vmatprep.subr.mxu0 0.0
    %1261 = vmatpush2.msra.mxu0 0.0
    %1262 = vmatprep.subr.mxu0 0.0
    %1263 = vmatpush2.msra.mxu0 0.0
    %1264 = vmatprep.subr.mxu0 0.0
    %1265 = vmatpush2.msra.mxu0 0.0
    %1266 = vmatprep.subr.mxu0 0.0
    %1267 = vmatpush2.msra.mxu0 0.0
    %1268 = vmatprep.subr.mxu0 0.0
    %1269 = vmatpush2.msra.mxu0 0.0
    %1270 = vmatprep.subr.mxu0 0.0
    %1271 = vmatpush2.msra.mxu0 0.0
    %1272 = vmatprep.subr.mxu0 0.0
    %1273 = vmatpush2.msra.mxu0 0.0
    %1274 = vmatprep.subr.mxu0 0.0
    %1275 = vmatpush2.msra.mxu0 0.0
    %1276 = vmatprep.mubr.f32.mxu0 0.0
    %v1277 = vand.u32 %v920, 4294901760
    %1278 = vmatmul.mubr.f32.gmra.mxu0 %v1277
    %v1279 = vpop.f32.mrf.mxu0
    %v1280 = vadd.f32 %v1209, %v1279
    %v1281 = vpop.f32.mrf.mxu0
    %1282 = vdwg.mxu0
    %1283 = vmatprep.subr.mxu0 0.0
    %1284 = vmatpush1.msra.mxu0 1.0
    %1285 = vmatprep.subr.mxu0 0.0
    %1286 = vmatpush1.msra.mxu0 1.0
    %1287 = vmatprep.subr.mxu0 0.0
    %1288 = vmatpush1.msra.mxu0 1.0
    %1289 = vmatprep.subr.mxu0 0.0
    %1290 = vmatpush1.msra.mxu0 1.0
    %1291 = vmatprep.subr.mxu0 0.0
    %1292 = vmatpush1.msra.mxu0 1.0
    %1293 = vmatprep.subr.mxu0 0.0
    %1294 = vmatpush1.msra.mxu0 1.0
    %1295 = vmatprep.subr.mxu0 0.0
    %1296 = vmatpush1.msra.mxu0 1.0
    %1297 = vmatprep.subr.mxu0 0.0
    %1298 = vmatpush1.msra.mxu0 1.0
    %1299 = vmatprep.subr.mxu0 0.0
    %1300 = vmatpush1.msra.mxu0 1.0
    %1301 = vmatprep.subr.mxu0 0.0
    %1302 = vmatpush1.msra.mxu0 1.0
    %1303 = vmatprep.subr.mxu0 0.0
    %1304 = vmatpush1.msra.mxu0 1.0
    %1305 = vmatprep.subr.mxu0 0.0
    %1306 = vmatpush1.msra.mxu0 1.0
    %1307 = vmatprep.subr.mxu0 0.0
    %1308 = vmatpush1.msra.mxu0 1.0
    %1309 = vmatprep.subr.mxu0 0.0
    %1310 = vmatpush1.msra.mxu0 1.0
    %1311 = vmatprep.subr.mxu0 0.0
    %1312 = vmatpush1.msra.mxu0 1.0
    %1313 = vmatprep.subr.mxu0 0.0
    %1314 = vmatpush1.msra.mxu0 1.0
    %1315 = vmatprep.subr.mxu0 0.0
    %1316 = vmatpush2.msra.mxu0 0.0
    %1317 = vmatprep.subr.mxu0 0.0
    %1318 = vmatpush2.msra.mxu0 0.0
    %1319 = vmatprep.subr.mxu0 0.0
    %1320 = vmatpush2.msra.mxu0 0.0
    %1321 = vmatprep.subr.mxu0 0.0
    %1322 = vmatpush2.msra.mxu0 0.0
    %1323 = vmatprep.subr.mxu0 0.0
    %1324 = vmatpush2.msra.mxu0 0.0
    %1325 = vmatprep.subr.mxu0 0.0
    %1326 = vmatpush2.msra.mxu0 0.0
    %1327 = vmatprep.subr.mxu0 0.0
    %1328 = vmatpush2.msra.mxu0 0.0
    %1329 = vmatprep.subr.mxu0 0.0
    %1330 = vmatpush2.msra.mxu0 0.0
    %1331 = vmatprep.subr.mxu0 0.0
    %1332 = vmatpush2.msra.mxu0 0.0
    %1333 = vmatprep.subr.mxu0 0.0
    %1334 = vmatpush2.msra.mxu0 0.0
    %1335 = vmatprep.subr.mxu0 0.0
    %1336 = vmatpush2.msra.mxu0 0.0
    %1337 = vmatprep.subr.mxu0 0.0
    %1338 = vmatpush2.msra.mxu0 0.0
    %1339 = vmatprep.subr.mxu0 0.0
    %1340 = vmatpush2.msra.mxu0 0.0
    %1341 = vmatprep.subr.mxu0 0.0
    %1342 = vmatpush2.msra.mxu0 0.0
    %1343 = vmatprep.subr.mxu0 0.0
    %1344 = vmatpush2.msra.mxu0 0.0
    %1345 = vmatprep.subr.mxu0 0.0
    %1346 = vmatpush2.msra.mxu0 0.0
    %1347 = vmatprep.mubr.f32.mxu0 0.0
    %v1348 = vand.u32 %v920, 4294901760
    %1349 = vmatmul.mubr.f32.gmra.mxu0 %v1348
    %v1350 = vpop.f32.mrf.mxu0
    %v1351 = vadd.f32 %v1280, %v1350
    %v1352 = vpop.f32.mrf.mxu0
    %1353 = vdwg.mxu0
    %v1354 = vmul.f32 %v49, %v51
    %1355 = vmatprep.subr.mxu0 0.0
    %1356 = vmatpush1.msra.mxu0 1.0
    %1357 = vmatprep.subr.mxu0 0.0
    %1358 = vmatpush1.msra.mxu0 1.0
    %1359 = vmatprep.subr.mxu0 0.0
    %1360 = vmatpush1.msra.mxu0 1.0
    %1361 = vmatprep.subr.mxu0 0.0
    %1362 = vmatpush1.msra.mxu0 1.0
    %1363 = vmatprep.subr.mxu0 0.0
    %1364 = vmatpush1.msra.mxu0 1.0
    %1365 = vmatprep.subr.mxu0 0.0
    %1366 = vmatpush1.msra.mxu0 1.0
    %1367 = vmatprep.subr.mxu0 0.0
    %1368 = vmatpush1.msra.mxu0 1.0
    %1369 = vmatprep.subr.mxu0 0.0
    %1370 = vmatpush1.msra.mxu0 1.0
    %1371 = vmatprep.subr.mxu0 0.0
    %1372 = vmatpush1.msra.mxu0 1.0
    %1373 = vmatprep.subr.mxu0 0.0
    %1374 = vmatpush1.msra.mxu0 1.0
    %1375 = vmatprep.subr.mxu0 0.0
    %1376 = vmatpush1.msra.mxu0 1.0
    %1377 = vmatprep.subr.mxu0 0.0
    %1378 = vmatpush1.msra.mxu0 1.0
    %1379 = vmatprep.subr.mxu0 0.0
    %1380 = vmatpush1.msra.mxu0 1.0
    %1381 = vmatprep.subr.mxu0 0.0
    %1382 = vmatpush1.msra.mxu0 1.0
    %1383 = vmatprep.subr.mxu0 0.0
    %1384 = vmatpush1.msra.mxu0 1.0
    %1385 = vmatprep.subr.mxu0 0.0
    %1386 = vmatpush1.msra.mxu0 1.0
    %1387 = vmatprep.subr.mxu0 0.0
    %1388 = vmatpush2.msra.mxu0 0.0
    %1389 = vmatprep.subr.mxu0 0.0
    %1390 = vmatpush2.msra.mxu0 0.0
    %1391 = vmatprep.subr.mxu0 0.0
    %1392 = vmatpush2.msra.mxu0 0.0
    %1393 = vmatprep.subr.mxu0 0.0
    %1394 = vmatpush2.msra.mxu0 0.0
    %1395 = vmatprep.subr.mxu0 0.0
    %1396 = vmatpush2.msra.mxu0 0.0
    %1397 = vmatprep.subr.mxu0 0.0
    %1398 = vmatpush2.msra.mxu0 0.0
    %1399 = vmatprep.subr.mxu0 0.0
    %1400 = vmatpush2.msra.mxu0 0.0
    %1401 = vmatprep.subr.mxu0 0.0
    %1402 = vmatpush2.msra.mxu0 0.0
    %1403 = vmatprep.subr.mxu0 0.0
    %1404 = vmatpush2.msra.mxu0 0.0
    %1405 = vmatprep.subr.mxu0 0.0
    %1406 = vmatpush2.msra.mxu0 0.0
    %1407 = vmatprep.subr.mxu0 0.0
    %1408 = vmatpush2.msra.mxu0 0.0
    %1409 = vmatprep.subr.mxu0 0.0
    %1410 = vmatpush2.msra.mxu0 0.0
    %1411 = vmatprep.subr.mxu0 0.0
    %1412 = vmatpush2.msra.mxu0 0.0
    %1413 = vmatprep.subr.mxu0 0.0
    %1414 = vmatpush2.msra.mxu0 0.0
    %1415 = vmatprep.subr.mxu0 0.0
    %1416 = vmatpush2.msra.mxu0 0.0
    %1417 = vmatprep.subr.mxu0 0.0
    %1418 = vmatpush2.msra.mxu0 0.0
    %1419 = vmatprep.mubr.f32.mxu0 0.0
    %v1420 = vand.u32 %v1354, 4294901760
    %v1421 = vsub.f32 %v1354, %v1420
    %v1422 = vand.u32 %v1421, 4294901760
    %v1423 = vsub.f32 %v1421, %v1422
    %v1424 = vand.u32 %v1423, 4294901760
    %1425 = vmatmul.mubr.f32.gmra.mxu0 %v1424
    %v1426 = vpop.f32.mrf.mxu0
    %v1427 = vadd.f32 0.0, %v1426
    %v1428 = vpop.f32.mrf.mxu0
    %1429 = vdwg.mxu0
    %1430 = vmatprep.subr.mxu0 0.0
    %1431 = vmatpush1.msra.mxu0 0.0
    %1432 = vmatprep.subr.mxu0 0.0
    %1433 = vmatpush1.msra.mxu0 0.0
    %1434 = vmatprep.subr.mxu0 0.0
    %1435 = vmatpush1.msra.mxu0 0.0
    %1436 = vmatprep.subr.mxu0 0.0
    %1437 = vmatpush1.msra.mxu0 0.0
    %1438 = vmatprep.subr.mxu0 0.0
    %1439 = vmatpush1.msra.mxu0 0.0
    %1440 = vmatprep.subr.mxu0 0.0
    %1441 = vmatpush1.msra.mxu0 0.0
    %1442 = vmatprep.subr.mxu0 0.0
    %1443 = vmatpush1.msra.mxu0 0.0
    %1444 = vmatprep.subr.mxu0 0.0
    %1445 = vmatpush1.msra.mxu0 0.0
    %1446 = vmatprep.subr.mxu0 0.0
    %1447 = vmatpush1.msra.mxu0 0.0
    %1448 = vmatprep.subr.mxu0 0.0
    %1449 = vmatpush1.msra.mxu0 0.0
    %1450 = vmatprep.subr.mxu0 0.0
    %1451 = vmatpush1.msra.mxu0 0.0
    %1452 = vmatprep.subr.mxu0 0.0
    %1453 = vmatpush1.msra.mxu0 0.0
    %1454 = vmatprep.subr.mxu0 0.0
    %1455 = vmatpush1.msra.mxu0 0.0
    %1456 = vmatprep.subr.mxu0 0.0
    %1457 = vmatpush1.msra.mxu0 0.0
    %1458 = vmatprep.subr.mxu0 0.0
    %1459 = vmatpush1.msra.mxu0 0.0
    %1460 = vmatprep.subr.mxu0 0.0
    %1461 = vmatpush1.msra.mxu0 0.0
    %1462 = vmatprep.subr.mxu0 0.0
    %1463 = vmatpush2.msra.mxu0 0.0
    %1464 = vmatprep.subr.mxu0 0.0
    %1465 = vmatpush2.msra.mxu0 0.0
    %1466 = vmatprep.subr.mxu0 0.0
    %1467 = vmatpush2.msra.mxu0 0.0
    %1468 = vmatprep.subr.mxu0 0.0
    %1469 = vmatpush2.msra.mxu0 0.0
    %1470 = vmatprep.subr.mxu0 0.0
    %1471 = vmatpush2.msra.mxu0 0.0
    %1472 = vmatprep.subr.mxu0 0.0
    %1473 = vmatpush2.msra.mxu0 0.0
    %1474 = vmatprep.subr.mxu0 0.0
    %1475 = vmatpush2.msra.mxu0 0.0
    %1476 = vmatprep.subr.mxu0 0.0
    %1477 = vmatpush2.msra.mxu0 0.0
    %1478 = vmatprep.subr.mxu0 0.0
    %1479 = vmatpush2.msra.mxu0 0.0
    %1480 = vmatprep.subr.mxu0 0.0
    %1481 = vmatpush2.msra.mxu0 0.0
    %1482 = vmatprep.subr.mxu0 0.0
    %1483 = vmatpush2.msra.mxu0 0.0
    %1484 = vmatprep.subr.mxu0 0.0
    %1485 = vmatpush2.msra.mxu0 0.0
    %1486 = vmatprep.subr.mxu0 0.0
    %1487 = vmatpush2.msra.mxu0 0.0
    %1488 = vmatprep.subr.mxu0 0.0
    %1489 = vmatpush2.msra.mxu0 0.0
    %1490 = vmatprep.subr.mxu0 0.0
    %1491 = vmatpush2.msra.mxu0 0.0
    %1492 = vmatprep.subr.mxu0 0.0
    %1493 = vmatpush2.msra.mxu0 0.0
    %1494 = vmatprep.mubr.f32.mxu0 0.0
    %v1495 = vand.u32 %v1354, 4294901760
    %1496 = vmatmul.mubr.f32.gmra.mxu0 %v1495
    %v1497 = vpop.f32.mrf.mxu0
    %v1498 = vadd.f32 %v1427, %v1497
    %v1499 = vpop.f32.mrf.mxu0
    %1500 = vdwg.mxu0
    %1501 = vmatprep.subr.mxu0 0.0
    %1502 = vmatpush1.msra.mxu0 0.0
    %1503 = vmatprep.subr.mxu0 0.0
    %1504 = vmatpush1.msra.mxu0 0.0
    %1505 = vmatprep.subr.mxu0 0.0
    %1506 = vmatpush1.msra.mxu0 0.0
    %1507 = vmatprep.subr.mxu0 0.0
    %1508 = vmatpush1.msra.mxu0 0.0
    %1509 = vmatprep.subr.mxu0 0.0
    %1510 = vmatpush1.msra.mxu0 0.0
    %1511 = vmatprep.subr.mxu0 0.0
    %1512 = vmatpush1.msra.mxu0 0.0
    %1513 = vmatprep.subr.mxu0 0.0
    %1514 = vmatpush1.msra.mxu0 0.0
    %1515 = vmatprep.subr.mxu0 0.0
    %1516 = vmatpush1.msra.mxu0 0.0
    %1517 = vmatprep.subr.mxu0 0.0
    %1518 = vmatpush1.msra.mxu0 0.0
    %1519 = vmatprep.subr.mxu0 0.0
    %1520 = vmatpush1.msra.mxu0 0.0
    %1521 = vmatprep.subr.mxu0 0.0
    %1522 = vmatpush1.msra.mxu0 0.0
    %1523 = vmatprep.subr.mxu0 0.0
    %1524 = vmatpush1.msra.mxu0 0.0
    %1525 = vmatprep.subr.mxu0 0.0
    %1526 = vmatpush1.msra.mxu0 0.0
    %1527 = vmatprep.subr.mxu0 0.0
    %1528 = vmatpush1.msra.mxu0 0.0
    %1529 = vmatprep.subr.mxu0 0.0
    %1530 = vmatpush1.msra.mxu0 0.0
    %1531 = vmatprep.subr.mxu0 0.0
    %1532 = vmatpush1.msra.mxu0 0.0
    %1533 = vmatprep.subr.mxu0 0.0
    %1534 = vmatpush2.msra.mxu0 0.0
    %1535 = vmatprep.subr.mxu0 0.0
    %1536 = vmatpush2.msra.mxu0 0.0
    %1537 = vmatprep.subr.mxu0 0.0
    %1538 = vmatpush2.msra.mxu0 0.0
    %1539 = vmatprep.subr.mxu0 0.0
    %1540 = vmatpush2.msra.mxu0 0.0
    %1541 = vmatprep.subr.mxu0 0.0
    %1542 = vmatpush2.msra.mxu0 0.0
    %1543 = vmatprep.subr.mxu0 0.0
    %1544 = vmatpush2.msra.mxu0 0.0
    %1545 = vmatprep.subr.mxu0 0.0
    %1546 = vmatpush2.msra.mxu0 0.0
    %1547 = vmatprep.subr.mxu0 0.0
    %1548 = vmatpush2.msra.mxu0 0.0
    %1549 = vmatprep.subr.mxu0 0.0
    %1550 = vmatpush2.msra.mxu0 0.0
    %1551 = vmatprep.subr.mxu0 0.0
    %1552 = vmatpush2.msra.mxu0 0.0
    %1553 = vmatprep.subr.mxu0 0.0
    %1554 = vmatpush2.msra.mxu0 0.0
    %1555 = vmatprep.subr.mxu0 0.0
    %1556 = vmatpush2.msra.mxu0 0.0
    %1557 = vmatprep.subr.mxu0 0.0
    %1558 = vmatpush2.msra.mxu0 0.0
    %1559 = vmatprep.subr.mxu0 0.0
    %1560 = vmatpush2.msra.mxu0 0.0
    %1561 = vmatprep.subr.mxu0 0.0
    %1562 = vmatpush2.msra.mxu0 0.0
    %1563 = vmatprep.subr.mxu0 0.0
    %1564 = vmatpush2.msra.mxu0 0.0
    %1565 = vmatprep.mubr.f32.mxu0 0.0
    %v1566 = vand.u32 %v1354, 4294901760
    %v1567 = vsub.f32 %v1354, %v1566
    %1568 = vmatmul.mubr.f32.gmra.mxu0 %v1567
    %v1569 = vpop.f32.mrf.mxu0
    %v1570 = vadd.f32 %v1498, %v1569
    %v1571 = vpop.f32.mrf.mxu0
    %1572 = vdwg.mxu0
    %1573 = vmatprep.subr.mxu0 0.0
    %1574 = vmatpush1.msra.mxu0 1.0
    %1575 = vmatprep.subr.mxu0 0.0
    %1576 = vmatpush1.msra.mxu0 1.0
    %1577 = vmatprep.subr.mxu0 0.0
    %1578 = vmatpush1.msra.mxu0 1.0
    %1579 = vmatprep.subr.mxu0 0.0
    %1580 = vmatpush1.msra.mxu0 1.0
    %1581 = vmatprep.subr.mxu0 0.0
    %1582 = vmatpush1.msra.mxu0 1.0
    %1583 = vmatprep.subr.mxu0 0.0
    %1584 = vmatpush1.msra.mxu0 1.0
    %1585 = vmatprep.subr.mxu0 0.0
    %1586 = vmatpush1.msra.mxu0 1.0
    %1587 = vmatprep.subr.mxu0 0.0
    %1588 = vmatpush1.msra.mxu0 1.0
    %1589 = vmatprep.subr.mxu0 0.0
    %1590 = vmatpush1.msra.mxu0 1.0
    %1591 = vmatprep.subr.mxu0 0.0
    %1592 = vmatpush1.msra.mxu0 1.0
    %1593 = vmatprep.subr.mxu0 0.0
    %1594 = vmatpush1.msra.mxu0 1.0
    %1595 = vmatprep.subr.mxu0 0.0
    %1596 = vmatpush1.msra.mxu0 1.0
    %1597 = vmatprep.subr.mxu0 0.0
    %1598 = vmatpush1.msra.mxu0 1.0
    %1599 = vmatprep.subr.mxu0 0.0
    %1600 = vmatpush1.msra.mxu0 1.0
    %1601 = vmatprep.subr.mxu0 0.0
    %1602 = vmatpush1.msra.mxu0 1.0
    %1603 = vmatprep.subr.mxu0 0.0
    %1604 = vmatpush1.msra.mxu0 1.0
    %1605 = vmatprep.subr.mxu0 0.0
    %1606 = vmatpush2.msra.mxu0 0.0
    %1607 = vmatprep.subr.mxu0 0.0
    %1608 = vmatpush2.msra.mxu0 0.0
    %1609 = vmatprep.subr.mxu0 0.0
    %1610 = vmatpush2.msra.mxu0 0.0
    %1611 = vmatprep.subr.mxu0 0.0
    %1612 = vmatpush2.msra.mxu0 0.0
    %1613 = vmatprep.subr.mxu0 0.0
    %1614 = vmatpush2.msra.mxu0 0.0
    %1615 = vmatprep.subr.mxu0 0.0
    %1616 = vmatpush2.msra.mxu0 0.0
    %1617 = vmatprep.subr.mxu0 0.0
    %1618 = vmatpush2.msra.mxu0 0.0
    %1619 = vmatprep.subr.mxu0 0.0
    %1620 = vmatpush2.msra.mxu0 0.0
    %1621 = vmatprep.subr.mxu0 0.0
    %1622 = vmatpush2.msra.mxu0 0.0
    %1623 = vmatprep.subr.mxu0 0.0
    %1624 = vmatpush2.msra.mxu0 0.0
    %1625 = vmatprep.subr.mxu0 0.0
    %1626 = vmatpush2.msra.mxu0 0.0
    %1627 = vmatprep.subr.mxu0 0.0
    %1628 = vmatpush2.msra.mxu0 0.0
    %1629 = vmatprep.subr.mxu0 0.0
    %1630 = vmatpush2.msra.mxu0 0.0
    %1631 = vmatprep.subr.mxu0 0.0
    %1632 = vmatpush2.msra.mxu0 0.0
    %1633 = vmatprep.subr.mxu0 0.0
    %1634 = vmatpush2.msra.mxu0 0.0
    %1635 = vmatprep.subr.mxu0 0.0
    %1636 = vmatpush2.msra.mxu0 0.0
    %1637 = vmatprep.mubr.f32.mxu0 0.0
    %v1638 = vand.u32 %v1354, 4294901760
    %v1639 = vsub.f32 %v1354, %v1638
    %v1640 = vand.u32 %v1639, 4294901760
    %1641 = vmatmul.mubr.f32.gmra.mxu0 %v1640
    %v1642 = vpop.f32.mrf.mxu0
    %v1643 = vadd.f32 %v1570, %v1642
    %v1644 = vpop.f32.mrf.mxu0
    %1645 = vdwg.mxu0
    %1646 = vmatprep.subr.mxu0 0.0
    %1647 = vmatpush1.msra.mxu0 0.0
    %1648 = vmatprep.subr.mxu0 0.0
    %1649 = vmatpush1.msra.mxu0 0.0
    %1650 = vmatprep.subr.mxu0 0.0
    %1651 = vmatpush1.msra.mxu0 0.0
    %1652 = vmatprep.subr.mxu0 0.0
    %1653 = vmatpush1.msra.mxu0 0.0
    %1654 = vmatprep.subr.mxu0 0.0
    %1655 = vmatpush1.msra.mxu0 0.0
    %1656 = vmatprep.subr.mxu0 0.0
    %1657 = vmatpush1.msra.mxu0 0.0
    %1658 = vmatprep.subr.mxu0 0.0
    %1659 = vmatpush1.msra.mxu0 0.0
    %1660 = vmatprep.subr.mxu0 0.0
    %1661 = vmatpush1.msra.mxu0 0.0
    %1662 = vmatprep.subr.mxu0 0.0
    %1663 = vmatpush1.msra.mxu0 0.0
    %1664 = vmatprep.subr.mxu0 0.0
    %1665 = vmatpush1.msra.mxu0 0.0
    %1666 = vmatprep.subr.mxu0 0.0
    %1667 = vmatpush1.msra.mxu0 0.0
    %1668 = vmatprep.subr.mxu0 0.0
    %1669 = vmatpush1.msra.mxu0 0.0
    %1670 = vmatprep.subr.mxu0 0.0
    %1671 = vmatpush1.msra.mxu0 0.0
    %1672 = vmatprep.subr.mxu0 0.0
    %1673 = vmatpush1.msra.mxu0 0.0
    %1674 = vmatprep.subr.mxu0 0.0
    %1675 = vmatpush1.msra.mxu0 0.0
    %1676 = vmatprep.subr.mxu0 0.0
    %1677 = vmatpush1.msra.mxu0 0.0
    %1678 = vmatprep.subr.mxu0 0.0
    %1679 = vmatpush2.msra.mxu0 0.0
    %1680 = vmatprep.subr.mxu0 0.0
    %1681 = vmatpush2.msra.mxu0 0.0
    %1682 = vmatprep.subr.mxu0 0.0
    %1683 = vmatpush2.msra.mxu0 0.0
    %1684 = vmatprep.subr.mxu0 0.0
    %1685 = vmatpush2.msra.mxu0 0.0
    %1686 = vmatprep.subr.mxu0 0.0
    %1687 = vmatpush2.msra.mxu0 0.0
    %1688 = vmatprep.subr.mxu0 0.0
    %1689 = vmatpush2.msra.mxu0 0.0
    %1690 = vmatprep.subr.mxu0 0.0
    %1691 = vmatpush2.msra.mxu0 0.0
    %1692 = vmatprep.subr.mxu0 0.0
    %1693 = vmatpush2.msra.mxu0 0.0
    %1694 = vmatprep.subr.mxu0 0.0
    %1695 = vmatpush2.msra.mxu0 0.0
    %1696 = vmatprep.subr.mxu0 0.0
    %1697 = vmatpush2.msra.mxu0 0.0
    %1698 = vmatprep.subr.mxu0 0.0
    %1699 = vmatpush2.msra.mxu0 0.0
    %1700 = vmatprep.subr.mxu0 0.0
    %1701 = vmatpush2.msra.mxu0 0.0
    %1702 = vmatprep.subr.mxu0 0.0
    %1703 = vmatpush2.msra.mxu0 0.0
    %1704 = vmatprep.subr.mxu0 0.0
    %1705 = vmatpush2.msra.mxu0 0.0
    %1706 = vmatprep.subr.mxu0 0.0
    %1707 = vmatpush2.msra.mxu0 0.0
    %1708 = vmatprep.subr.mxu0 0.0
    %1709 = vmatpush2.msra.mxu0 0.0
    %1710 = vmatprep.mubr.f32.mxu0 0.0
    %v1711 = vand.u32 %v1354, 4294901760
    %1712 = vmatmul.mubr.f32.gmra.mxu0 %v1711
    %v1713 = vpop.f32.mrf.mxu0
    %v1714 = vadd.f32 %v1643, %v1713
    %v1715 = vpop.f32.mrf.mxu0
    %1716 = vdwg.mxu0
    %1717 = vmatprep.subr.mxu0 0.0
    %1718 = vmatpush1.msra.mxu0 1.0
    %1719 = vmatprep.subr.mxu0 0.0
    %1720 = vmatpush1.msra.mxu0 1.0
    %1721 = vmatprep.subr.mxu0 0.0
    %1722 = vmatpush1.msra.mxu0 1.0
    %1723 = vmatprep.subr.mxu0 0.0
    %1724 = vmatpush1.msra.mxu0 1.0
    %1725 = vmatprep.subr.mxu0 0.0
    %1726 = vmatpush1.msra.mxu0 1.0
    %1727 = vmatprep.subr.mxu0 0.0
    %1728 = vmatpush1.msra.mxu0 1.0
    %1729 = vmatprep.subr.mxu0 0.0
    %1730 = vmatpush1.msra.mxu0 1.0
    %1731 = vmatprep.subr.mxu0 0.0
    %1732 = vmatpush1.msra.mxu0 1.0
    %1733 = vmatprep.subr.mxu0 0.0
    %1734 = vmatpush1.msra.mxu0 1.0
    %1735 = vmatprep.subr.mxu0 0.0
    %1736 = vmatpush1.msra.mxu0 1.0
    %1737 = vmatprep.subr.mxu0 0.0
    %1738 = vmatpush1.msra.mxu0 1.0
    %1739 = vmatprep.subr.mxu0 0.0
    %1740 = vmatpush1.msra.mxu0 1.0
    %1741 = vmatprep.subr.mxu0 0.0
    %1742 = vmatpush1.msra.mxu0 1.0
    %1743 = vmatprep.subr.mxu0 0.0
    %1744 = vmatpush1.msra.mxu0 1.0
    %1745 = vmatprep.subr.mxu0 0.0
    %1746 = vmatpush1.msra.mxu0 1.0
    %1747 = vmatprep.subr.mxu0 0.0
    %1748 = vmatpush1.msra.mxu0 1.0
    %1749 = vmatprep.subr.mxu0 0.0
    %1750 = vmatpush2.msra.mxu0 0.0
    %1751 = vmatprep.subr.mxu0 0.0
    %1752 = vmatpush2.msra.mxu0 0.0
    %1753 = vmatprep.subr.mxu0 0.0
    %1754 = vmatpush2.msra.mxu0 0.0
    %1755 = vmatprep.subr.mxu0 0.0
    %1756 = vmatpush2.msra.mxu0 0.0
    %1757 = vmatprep.subr.mxu0 0.0
    %1758 = vmatpush2.msra.mxu0 0.0
    %1759 = vmatprep.subr.mxu0 0.0
    %1760 = vmatpush2.msra.mxu0 0.0
    %1761 = vmatprep.subr.mxu0 0.0
    %1762 = vmatpush2.msra.mxu0 0.0
    %1763 = vmatprep.subr.mxu0 0.0
    %1764 = vmatpush2.msra.mxu0 0.0
    %1765 = vmatprep.subr.mxu0 0.0
    %1766 = vmatpush2.msra.mxu0 0.0
    %1767 = vmatprep.subr.mxu0 0.0
    %1768 = vmatpush2.msra.mxu0 0.0
    %1769 = vmatprep.subr.mxu0 0.0
    %1770 = vmatpush2.msra.mxu0 0.0
    %1771 = vmatprep.subr.mxu0 0.0
    %1772 = vmatpush2.msra.mxu0 0.0
    %1773 = vmatprep.subr.mxu0 0.0
    %1774 = vmatpush2.msra.mxu0 0.0
    %1775 = vmatprep.subr.mxu0 0.0
    %1776 = vmatpush2.msra.mxu0 0.0
    %1777 = vmatprep.subr.mxu0 0.0
    %1778 = vmatpush2.msra.mxu0 0.0
    %1779 = vmatprep.subr.mxu0 0.0
    %1780 = vmatpush2.msra.mxu0 0.0
    %1781 = vmatprep.mubr.f32.mxu0 0.0
    %v1782 = vand.u32 %v1354, 4294901760
    %1783 = vmatmul.mubr.f32.gmra.mxu0 %v1782
    %v1784 = vpop.f32.mrf.mxu0
    %v1785 = vadd.f32 %v1714, %v1784
    %v1786 = vpop.f32.mrf.mxu0
    %1787 = vdwg.mxu0
    %v1788 = vmul.f32 %v51, %v51
    %1789 = vmatprep.subr.mxu0 0.0
    %1790 = vmatpush1.msra.mxu0 1.0
    %1791 = vmatprep.subr.mxu0 0.0
    %1792 = vmatpush1.msra.mxu0 1.0
    %1793 = vmatprep.subr.mxu0 0.0
    %1794 = vmatpush1.msra.mxu0 1.0
    %1795 = vmatprep.subr.mxu0 0.0
    %1796 = vmatpush1.msra.mxu0 1.0
    %1797 = vmatprep.subr.mxu0 0.0
    %1798 = vmatpush1.msra.mxu0 1.0
    %1799 = vmatprep.subr.mxu0 0.0
    %1800 = vmatpush1.msra.mxu0 1.0
    %1801 = vmatprep.subr.mxu0 0.0
    %1802 = vmatpush1.msra.mxu0 1.0
    %1803 = vmatprep.subr.mxu0 0.0
    %1804 = vmatpush1.msra.mxu0 1.0
    %1805 = vmatprep.subr.mxu0 0.0
    %1806 = vmatpush1.msra.mxu0 1.0
    %1807 = vmatprep.subr.mxu0 0.0
    %1808 = vmatpush1.msra.mxu0 1.0
    %1809 = vmatprep.subr.mxu0 0.0
    %1810 = vmatpush1.msra.mxu0 1.0
    %1811 = vmatprep.subr.mxu0 0.0
    %1812 = vmatpush1.msra.mxu0 1.0
    %1813 = vmatprep.subr.mxu0 0.0
    %1814 = vmatpush1.msra.mxu0 1.0
    %1815 = vmatprep.subr.mxu0 0.0
    %1816 = vmatpush1.msra.mxu0 1.0
    %1817 = vmatprep.subr.mxu0 0.0
    %1818 = vmatpush1.msra.mxu0 1.0
    %1819 = vmatprep.subr.mxu0 0.0
    %1820 = vmatpush1.msra.mxu0 1.0
    %1821 = vmatprep.subr.mxu0 0.0
    %1822 = vmatpush2.msra.mxu0 0.0
    %1823 = vmatprep.subr.mxu0 0.0
    %1824 = vmatpush2.msra.mxu0 0.0
    %1825 = vmatprep.subr.mxu0 0.0
    %1826 = vmatpush2.msra.mxu0 0.0
    %1827 = vmatprep.subr.mxu0 0.0
    %1828 = vmatpush2.msra.mxu0 0.0
    %1829 = vmatprep.subr.mxu0 0.0
    %1830 = vmatpush2.msra.mxu0 0.0
    %1831 = vmatprep.subr.mxu0 0.0
    %1832 = vmatpush2.msra.mxu0 0.0
    %1833 = vmatprep.subr.mxu0 0.0
    %1834 = vmatpush2.msra.mxu0 0.0
    %1835 = vmatprep.subr.mxu0 0.0
    %1836 = vmatpush2.msra.mxu0 0.0
    %1837 = vmatprep.subr.mxu0 0.0
    %1838 = vmatpush2.msra.mxu0 0.0
    %1839 = vmatprep.subr.mxu0 0.0
    %1840 = vmatpush2.msra.mxu0 0.0
    %1841 = vmatprep.subr.mxu0 0.0
    %1842 = vmatpush2.msra.mxu0 0.0
    %1843 = vmatprep.subr.mxu0 0.0
    %1844 = vmatpush2.msra.mxu0 0.0
    %1845 = vmatprep.subr.mxu0 0.0
    %1846 = vmatpush2.msra.mxu0 0.0
    %1847 = vmatprep.subr.mxu0 0.0
    %1848 = vmatpush2.msra.mxu0 0.0
    %1849 = vmatprep.subr.mxu0 0.0
    %1850 = vmatpush2.msra.mxu0 0.0
    %1851 = vmatprep.subr.mxu0 0.0
    %1852 = vmatpush2.msra.mxu0 0.0
    %1853 = vmatprep.mubr.f32.mxu0 0.0
    %v1854 = vand.u32 %v1788, 4294901760
    %v1855 = vsub.f32 %v1788, %v1854
    %v1856 = vand.u32 %v1855, 4294901760
    %v1857 = vsub.f32 %v1855, %v1856
    %v1858 = vand.u32 %v1857, 4294901760
    %1859 = vmatmul.mubr.f32.gmra.mxu0 %v1858
    %v1860 = vpop.f32.mrf.mxu0
    %v1861 = vadd.f32 0.0, %v1860
    %v1862 = vpop.f32.mrf.mxu0
    %1863 = vdwg.mxu0
    %1864 = vmatprep.subr.mxu0 0.0
    %1865 = vmatpush1.msra.mxu0 0.0
    %1866 = vmatprep.subr.mxu0 0.0
    %1867 = vmatpush1.msra.mxu0 0.0
    %1868 = vmatprep.subr.mxu0 0.0
    %1869 = vmatpush1.msra.mxu0 0.0
    %1870 = vmatprep.subr.mxu0 0.0
    %1871 = vmatpush1.msra.mxu0 0.0
    %1872 = vmatprep.subr.mxu0 0.0
    %1873 = vmatpush1.msra.mxu0 0.0
    %1874 = vmatprep.subr.mxu0 0.0
    %1875 = vmatpush1.msra.mxu0 0.0
    %1876 = vmatprep.subr.mxu0 0.0
    %1877 = vmatpush1.msra.mxu0 0.0
    %1878 = vmatprep.subr.mxu0 0.0
    %1879 = vmatpush1.msra.mxu0 0.0
    %1880 = vmatprep.subr.mxu0 0.0
    %1881 = vmatpush1.msra.mxu0 0.0
    %1882 = vmatprep.subr.mxu0 0.0
    %1883 = vmatpush1.msra.mxu0 0.0
    %1884 = vmatprep.subr.mxu0 0.0
    %1885 = vmatpush1.msra.mxu0 0.0
    %1886 = vmatprep.subr.mxu0 0.0
    %1887 = vmatpush1.msra.mxu0 0.0
    %1888 = vmatprep.subr.mxu0 0.0
    %1889 = vmatpush1.msra.mxu0 0.0
    %1890 = vmatprep.subr.mxu0 0.0
    %1891 = vmatpush1.msra.mxu0 0.0
    %1892 = vmatprep.subr.mxu0 0.0
    %1893 = vmatpush1.msra.mxu0 0.0
    %1894 = vmatprep.subr.mxu0 0.0
    %1895 = vmatpush1.msra.mxu0 0.0
    %1896 = vmatprep.subr.mxu0 0.0
    %1897 = vmatpush2.msra.mxu0 0.0
    %1898 = vmatprep.subr.mxu0 0.0
    %1899 = vmatpush2.msra.mxu0 0.0
    %1900 = vmatprep.subr.mxu0 0.0
    %1901 = vmatpush2.msra.mxu0 0.0
    %1902 = vmatprep.subr.mxu0 0.0
    %1903 = vmatpush2.msra.mxu0 0.0
    %1904 = vmatprep.subr.mxu0 0.0
    %1905 = vmatpush2.msra.mxu0 0.0
    %1906 = vmatprep.subr.mxu0 0.0
    %1907 = vmatpush2.msra.mxu0 0.0
    %1908 = vmatprep.subr.mxu0 0.0
    %1909 = vmatpush2.msra.mxu0 0.0
    %1910 = vmatprep.subr.mxu0 0.0
    %1911 = vmatpush2.msra.mxu0 0.0
    %1912 = vmatprep.subr.mxu0 0.0
    %1913 = vmatpush2.msra.mxu0 0.0
    %1914 = vmatprep.subr.mxu0 0.0
    %1915 = vmatpush2.msra.mxu0 0.0
    %1916 = vmatprep.subr.mxu0 0.0
    %1917 = vmatpush2.msra.mxu0 0.0
    %1918 = vmatprep.subr.mxu0 0.0
    %1919 = vmatpush2.msra.mxu0 0.0
    %1920 = vmatprep.subr.mxu0 0.0
    %1921 = vmatpush2.msra.mxu0 0.0
    %1922 = vmatprep.subr.mxu0 0.0
    %1923 = vmatpush2.msra.mxu0 0.0
    %1924 = vmatprep.subr.mxu0 0.0
    %1925 = vmatpush2.msra.mxu0 0.0
    %1926 = vmatprep.subr.mxu0 0.0
    %1927 = vmatpush2.msra.mxu0 0.0
    %1928 = vmatprep.mubr.f32.mxu0 0.0
    %v1929 = vand.u32 %v1788, 4294901760
    %1930 = vmatmul.mubr.f32.gmra.mxu0 %v1929
    %v1931 = vpop.f32.mrf.mxu0
    %v1932 = vadd.f32 %v1861, %v1931
    %v1933 = vpop.f32.mrf.mxu0
    %1934 = vdwg.mxu0
    %1935 = vmatprep.subr.mxu0 0.0
    %1936 = vmatpush1.msra.mxu0 0.0
    %1937 = vmatprep.subr.mxu0 0.0
    %1938 = vmatpush1.msra.mxu0 0.0
    %1939 = vmatprep.subr.mxu0 0.0
    %1940 = vmatpush1.msra.mxu0 0.0
    %1941 = vmatprep.subr.mxu0 0.0
    %1942 = vmatpush1.msra.mxu0 0.0
    %1943 = vmatprep.subr.mxu0 0.0
    %1944 = vmatpush1.msra.mxu0 0.0
    %1945 = vmatprep.subr.mxu0 0.0
    %1946 = vmatpush1.msra.mxu0 0.0
    %1947 = vmatprep.subr.mxu0 0.0
    %1948 = vmatpush1.msra.mxu0 0.0
    %1949 = vmatprep.subr.mxu0 0.0
    %1950 = vmatpush1.msra.mxu0 0.0
    %1951 = vmatprep.subr.mxu0 0.0
    %1952 = vmatpush1.msra.mxu0 0.0
    %1953 = vmatprep.subr.mxu0 0.0
    %1954 = vmatpush1.msra.mxu0 0.0
    %1955 = vmatprep.subr.mxu0 0.0
    %1956 = vmatpush1.msra.mxu0 0.0
    %1957 = vmatprep.subr.mxu0 0.0
    %1958 = vmatpush1.msra.mxu0 0.0
    %1959 = vmatprep.subr.mxu0 0.0
    %1960 = vmatpush1.msra.mxu0 0.0
    %1961 = vmatprep.subr.mxu0 0.0
    %1962 = vmatpush1.msra.mxu0 0.0
    %1963 = vmatprep.subr.mxu0 0.0
    %1964 = vmatpush1.msra.mxu0 0.0
    %1965 = vmatprep.subr.mxu0 0.0
    %1966 = vmatpush1.msra.mxu0 0.0
    %1967 = vmatprep.subr.mxu0 0.0
    %1968 = vmatpush2.msra.mxu0 0.0
    %1969 = vmatprep.subr.mxu0 0.0
    %1970 = vmatpush2.msra.mxu0 0.0
    %1971 = vmatprep.subr.mxu0 0.0
    %1972 = vmatpush2.msra.mxu0 0.0
    %1973 = vmatprep.subr.mxu0 0.0
    %1974 = vmatpush2.msra.mxu0 0.0
    %1975 = vmatprep.subr.mxu0 0.0
    %1976 = vmatpush2.msra.mxu0 0.0
    %1977 = vmatprep.subr.mxu0 0.0
    %1978 = vmatpush2.msra.mxu0 0.0
    %1979 = vmatprep.subr.mxu0 0.0
    %1980 = vmatpush2.msra.mxu0 0.0
    %1981 = vmatprep.subr.mxu0 0.0
    %1982 = vmatpush2.msra.mxu0 0.0
    %1983 = vmatprep.subr.mxu0 0.0
    %1984 = vmatpush2.msra.mxu0 0.0
    %1985 = vmatprep.subr.mxu0 0.0
    %1986 = vmatpush2.msra.mxu0 0.0
    %1987 = vmatprep.subr.mxu0 0.0
    %1988 = vmatpush2.msra.mxu0 0.0
    %1989 = vmatprep.subr.mxu0 0.0
    %1990 = vmatpush2.msra.mxu0 0.0
    %1991 = vmatprep.subr.mxu0 0.0
    %1992 = vmatpush2.msra.mxu0 0.0
    %1993 = vmatprep.subr.mxu0 0.0
    %1994 = vmatpush2.msra.mxu0 0.0
    %1995 = vmatprep.subr.mxu0 0.0
    %1996 = vmatpush2.msra.mxu0 0.0
    %1997 = vmatprep.subr.mxu0 0.0
    %1998 = vmatpush2.msra.mxu0 0.0
    %1999 = vmatprep.mubr.f32.mxu0 0.0
    %v2000 = vand.u32 %v1788, 4294901760
    %v2001 = vsub.f32 %v1788, %v2000
    %2002 = vmatmul.mubr.f32.gmra.mxu0 %v2001
    %v2003 = vpop.f32.mrf.mxu0
    %v2004 = vadd.f32 %v1932, %v2003
    %v2005 = vpop.f32.mrf.mxu0
    %2006 = vdwg.mxu0
    %2007 = vmatprep.subr.mxu0 0.0
    %2008 = vmatpush1.msra.mxu0 1.0
    %2009 = vmatprep.subr.mxu0 0.0
    %2010 = vmatpush1.msra.mxu0 1.0
    %2011 = vmatprep.subr.mxu0 0.0
    %2012 = vmatpush1.msra.mxu0 1.0
    %2013 = vmatprep.subr.mxu0 0.0
    %2014 = vmatpush1.msra.mxu0 1.0
    %2015 = vmatprep.subr.mxu0 0.0
    %2016 = vmatpush1.msra.mxu0 1.0
    %2017 = vmatprep.subr.mxu0 0.0
    %2018 = vmatpush1.msra.mxu0 1.0
    %2019 = vmatprep.subr.mxu0 0.0
    %2020 = vmatpush1.msra.mxu0 1.0
    %2021 = vmatprep.subr.mxu0 0.0
    %2022 = vmatpush1.msra.mxu0 1.0
    %2023 = vmatprep.subr.mxu0 0.0
    %2024 = vmatpush1.msra.mxu0 1.0
    %2025 = vmatprep.subr.mxu0 0.0
    %2026 = vmatpush1.msra.mxu0 1.0
    %2027 = vmatprep.subr.mxu0 0.0
    %2028 = vmatpush1.msra.mxu0 1.0
    %2029 = vmatprep.subr.mxu0 0.0
    %2030 = vmatpush1.msra.mxu0 1.0
    %2031 = vmatprep.subr.mxu0 0.0
    %2032 = vmatpush1.msra.mxu0 1.0
    %2033 = vmatprep.subr.mxu0 0.0
    %2034 = vmatpush1.msra.mxu0 1.0
    %2035 = vmatprep.subr.mxu0 0.0
    %2036 = vmatpush1.msra.mxu0 1.0
    %2037 = vmatprep.subr.mxu0 0.0
    %2038 = vmatpush1.msra.mxu0 1.0
    %2039 = vmatprep.subr.mxu0 0.0
    %2040 = vmatpush2.msra.mxu0 0.0
    %2041 = vmatprep.subr.mxu0 0.0
    %2042 = vmatpush2.msra.mxu0 0.0
    %2043 = vmatprep.subr.mxu0 0.0
    %2044 = vmatpush2.msra.mxu0 0.0
    %2045 = vmatprep.subr.mxu0 0.0
    %2046 = vmatpush2.msra.mxu0 0.0
    %2047 = vmatprep.subr.mxu0 0.0
    %2048 = vmatpush2.msra.mxu0 0.0
    %2049 = vmatprep.subr.mxu0 0.0
    %2050 = vmatpush2.msra.mxu0 0.0
    %2051 = vmatprep.subr.mxu0 0.0
    %2052 = vmatpush2.msra.mxu0 0.0
    %2053 = vmatprep.subr.mxu0 0.0
    %2054 = vmatpush2.msra.mxu0 0.0
    %2055 = vmatprep.subr.mxu0 0.0
    %2056 = vmatpush2.msra.mxu0 0.0
    %2057 = vmatprep.subr.mxu0 0.0
    %2058 = vmatpush2.msra.mxu0 0.0
    %2059 = vmatprep.subr.mxu0 0.0
    %2060 = vmatpush2.msra.mxu0 0.0
    %2061 = vmatprep.subr.mxu0 0.0
    %2062 = vmatpush2.msra.mxu0 0.0
    %2063 = vmatprep.subr.mxu0 0.0
    %2064 = vmatpush2.msra.mxu0 0.0
    %2065 = vmatprep.subr.mxu0 0.0
    %2066 = vmatpush2.msra.mxu0 0.0
    %2067 = vmatprep.subr.mxu0 0.0
    %2068 = vmatpush2.msra.mxu0 0.0
    %2069 = vmatprep.subr.mxu0 0.0
    %2070 = vmatpush2.msra.mxu0 0.0
    %2071 = vmatprep.mubr.f32.mxu0 0.0
    %v2072 = vand.u32 %v1788, 4294901760
    %v2073 = vsub.f32 %v1788, %v2072
    %v2074 = vand.u32 %v2073, 4294901760
    %2075 = vmatmul.mubr.f32.gmra.mxu0 %v2074
    %v2076 = vpop.f32.mrf.mxu0
    %v2077 = vadd.f32 %v2004, %v2076
    %v2078 = vpop.f32.mrf.mxu0
    %2079 = vdwg.mxu0
    %2080 = vmatprep.subr.mxu0 0.0
    %2081 = vmatpush1.msra.mxu0 0.0
    %2082 = vmatprep.subr.mxu0 0.0
    %2083 = vmatpush1.msra.mxu0 0.0
    %2084 = vmatprep.subr.mxu0 0.0
    %2085 = vmatpush1.msra.mxu0 0.0
    %2086 = vmatprep.subr.mxu0 0.0
    %2087 = vmatpush1.msra.mxu0 0.0
    %2088 = vmatprep.subr.mxu0 0.0
    %2089 = vmatpush1.msra.mxu0 0.0
    %2090 = vmatprep.subr.mxu0 0.0
    %2091 = vmatpush1.msra.mxu0 0.0
    %2092 = vmatprep.subr.mxu0 0.0
    %2093 = vmatpush1.msra.mxu0 0.0
    %2094 = vmatprep.subr.mxu0 0.0
    %2095 = vmatpush1.msra.mxu0 0.0
    %2096 = vmatprep.subr.mxu0 0.0
    %2097 = vmatpush1.msra.mxu0 0.0
    %2098 = vmatprep.subr.mxu0 0.0
    %2099 = vmatpush1.msra.mxu0 0.0
    %2100 = vmatprep.subr.mxu0 0.0
    %2101 = vmatpush1.msra.mxu0 0.0
    %2102 = vmatprep.subr.mxu0 0.0
    %2103 = vmatpush1.msra.mxu0 0.0
    %2104 = vmatprep.subr.mxu0 0.0
    %2105 = vmatpush1.msra.mxu0 0.0
    %2106 = vmatprep.subr.mxu0 0.0
    %2107 = vmatpush1.msra.mxu0 0.0
    %2108 = vmatprep.subr.mxu0 0.0
    %2109 = vmatpush1.msra.mxu0 0.0
    %2110 = vmatprep.subr.mxu0 0.0
    %2111 = vmatpush1.msra.mxu0 0.0
    %2112 = vmatprep.subr.mxu0 0.0
    %2113 = vmatpush2.msra.mxu0 0.0
    %2114 = vmatprep.subr.mxu0 0.0
    %2115 = vmatpush2.msra.mxu0 0.0
    %2116 = vmatprep.subr.mxu0 0.0
    %2117 = vmatpush2.msra.mxu0 0.0
    %2118 = vmatprep.subr.mxu0 0.0
    %2119 = vmatpush2.msra.mxu0 0.0
    %2120 = vmatprep.subr.mxu0 0.0
    %2121 = vmatpush2.msra.mxu0 0.0
    %2122 = vmatprep.subr.mxu0 0.0
    %2123 = vmatpush2.msra.mxu0 0.0
    %2124 = vmatprep.subr.mxu0 0.0
    %2125 = vmatpush2.msra.mxu0 0.0
    %2126 = vmatprep.subr.mxu0 0.0
    %2127 = vmatpush2.msra.mxu0 0.0
    %2128 = vmatprep.subr.mxu0 0.0
    %2129 = vmatpush2.msra.mxu0 0.0
    %2130 = vmatprep.subr.mxu0 0.0
    %2131 = vmatpush2.msra.mxu0 0.0
    %2132 = vmatprep.subr.mxu0 0.0
    %2133 = vmatpush2.msra.mxu0 0.0
    %2134 = vmatprep.subr.mxu0 0.0
    %2135 = vmatpush2.msra.mxu0 0.0
    %2136 = vmatprep.subr.mxu0 0.0
    %2137 = vmatpush2.msra.mxu0 0.0
    %2138 = vmatprep.subr.mxu0 0.0
    %2139 = vmatpush2.msra.mxu0 0.0
    %2140 = vmatprep.subr.mxu0 0.0
    %2141 = vmatpush2.msra.mxu0 0.0
    %2142 = vmatprep.subr.mxu0 0.0
    %2143 = vmatpush2.msra.mxu0 0.0
    %2144 = vmatprep.mubr.f32.mxu0 0.0
    %v2145 = vand.u32 %v1788, 4294901760
    %2146 = vmatmul.mubr.f32.gmra.mxu0 %v2145
    %v2147 = vpop.f32.mrf.mxu0
    %v2148 = vadd.f32 %v2077, %v2147
    %v2149 = vpop.f32.mrf.mxu0
    %2150 = vdwg.mxu0
    %2151 = vmatprep.subr.mxu0 0.0
    %2152 = vmatpush1.msra.mxu0 1.0
    %2153 = vmatprep.subr.mxu0 0.0
    %2154 = vmatpush1.msra.mxu0 1.0
    %2155 = vmatprep.subr.mxu0 0.0
    %2156 = vmatpush1.msra.mxu0 1.0
    %2157 = vmatprep.subr.mxu0 0.0
    %2158 = vmatpush1.msra.mxu0 1.0
    %2159 = vmatprep.subr.mxu0 0.0
    %2160 = vmatpush1.msra.mxu0 1.0
    %2161 = vmatprep.subr.mxu0 0.0
    %2162 = vmatpush1.msra.mxu0 1.0
    %2163 = vmatprep.subr.mxu0 0.0
    %2164 = vmatpush1.msra.mxu0 1.0
    %2165 = vmatprep.subr.mxu0 0.0
    %2166 = vmatpush1.msra.mxu0 1.0
    %2167 = vmatprep.subr.mxu0 0.0
    %2168 = vmatpush1.msra.mxu0 1.0
    %2169 = vmatprep.subr.mxu0 0.0
    %2170 = vmatpush1.msra.mxu0 1.0
    %2171 = vmatprep.subr.mxu0 0.0
    %2172 = vmatpush1.msra.mxu0 1.0
    %2173 = vmatprep.subr.mxu0 0.0
    %2174 = vmatpush1.msra.mxu0 1.0
    %2175 = vmatprep.subr.mxu0 0.0
    %2176 = vmatpush1.msra.mxu0 1.0
    %2177 = vmatprep.subr.mxu0 0.0
    %2178 = vmatpush1.msra.mxu0 1.0
    %2179 = vmatprep.subr.mxu0 0.0
    %2180 = vmatpush1.msra.mxu0 1.0
    %2181 = vmatprep.subr.mxu0 0.0
    %2182 = vmatpush1.msra.mxu0 1.0
    %2183 = vmatprep.subr.mxu0 0.0
    %2184 = vmatpush2.msra.mxu0 0.0
    %2185 = vmatprep.subr.mxu0 0.0
    %2186 = vmatpush2.msra.mxu0 0.0
    %2187 = vmatprep.subr.mxu0 0.0
    %2188 = vmatpush2.msra.mxu0 0.0
    %2189 = vmatprep.subr.mxu0 0.0
    %2190 = vmatpush2.msra.mxu0 0.0
    %2191 = vmatprep.subr.mxu0 0.0
    %2192 = vmatpush2.msra.mxu0 0.0
    %2193 = vmatprep.subr.mxu0 0.0
    %2194 = vmatpush2.msra.mxu0 0.0
    %2195 = vmatprep.subr.mxu0 0.0
    %2196 = vmatpush2.msra.mxu0 0.0
    %2197 = vmatprep.subr.mxu0 0.0
    %2198 = vmatpush2.msra.mxu0 0.0
    %2199 = vmatprep.subr.mxu0 0.0
    %2200 = vmatpush2.msra.mxu0 0.0
    %2201 = vmatprep.subr.mxu0 0.0
    %2202 = vmatpush2.msra.mxu0 0.0
    %2203 = vmatprep.subr.mxu0 0.0
    %2204 = vmatpush2.msra.mxu0 0.0
    %2205 = vmatprep.subr.mxu0 0.0
    %2206 = vmatpush2.msra.mxu0 0.0
    %2207 = vmatprep.subr.mxu0 0.0
    %2208 = vmatpush2.msra.mxu0 0.0
    %2209 = vmatprep.subr.mxu0 0.0
    %2210 = vmatpush2.msra.mxu0 0.0
    %2211 = vmatprep.subr.mxu0 0.0
    %2212 = vmatpush2.msra.mxu0 0.0
    %2213 = vmatprep.subr.mxu0 0.0
    %2214 = vmatpush2.msra.mxu0 0.0
    %2215 = vmatprep.mubr.f32.mxu0 0.0
    %v2216 = vand.u32 %v1788, 4294901760
    %2217 = vmatmul.mubr.f32.gmra.mxu0 %v2216
    %v2218 = vpop.f32.mrf.mxu0
    %v2219 = vadd.f32 %v2148, %v2218
    %v2220 = vpop.f32.mrf.mxu0
    %2221 = vdwg.mxu0
    %v2222 = vmul.f32 %v483, %v1351
    %v2223 = vmax.f32 %v2222, 1e-16
    %v2224 = vrsqrt.pop %v2223
    %v2225 = vmul.f32 %v917, %v2224
    %v2226 = vmul.f32 %v483, %v2219
    %v2227 = vmax.f32 %v2226, 1e-16
    %v2228 = vrsqrt.pop %v2227
    %v2229 = vmul.f32 %v1785, %v2228
    %v2230 = vsub.f32 1.0, %v2225
    %v2231 = vadd.f32 %v2230, %v2229
    %v2232 = vmax.f32 %v2231, 0.0
    %s2233 = smul.u32 0, 8
    %v2234 = vlaneseq
    %v2235 = vshrl.u32 %v2234, 7
    %v2236 = vstv %s2233
    %v2237 = vadd.s32 %v2236, %v2235
    %vm2238 = vcmp.lt.s32.totalorder %v2237, 8
    %v2239 = vsel %vm2238, %v2232, 0.0
    %vm2240 = vcmask 7168
    %2241 = vst.msk [vmem:[%s3] sm:$0xff] %vm2240, %v2239
    // Predicated region
    $region26: #{tpu_custom_call.1} parent=1 // pred_check
      _
    $region27: #{tpu_custom_call.1} parent=1 // pred_check_branch
      %2243 = sbr.rel (0) target = $region29
    $region28: #{tpu_custom_call.1} parent=1 // pred_region
      _
    $region29: #{tpu_custom_call.1} parent=1 // pred_fallthru
      _
    // Predicated region
    $region30: #{tpu_custom_call.1} parent=1 // pred_check
      _
    $region31: #{tpu_custom_call.1} parent=1 // pred_check_branch
      %2245 = sbr.rel (0) target = $region33
    $region32: #{tpu_custom_call.1} parent=1 // pred_region
      _
    $region33: #{tpu_custom_call.1} parent=1 // pred_fallthru
      _
    %2246 = vsyncpa [#allocation3], 1
    %2247 = vsyncpa [#allocation5], 1

</llo_original>
